<compile_context>
chip_gen: v6e
topology: v6e:2x2x1
jax: 0.10.0
libtpu: 0.0.40
codegen_flags: <defaults>
</compile_context>

<pallas_src>
import math

import jax
import jax.numpy as jnp
from jax import lax
from jax.experimental import pallas as pl
from jax.experimental.pallas import tpu as pltpu

OUTPUT_DIC_SIZE = 8  # synthetic tag-set size (global in the original script)

_VMEM_LIMIT = 32 * 1024 * 1024  # explicit, portable across v5e/v6e/v7x


# --------------------------------------------------------------------------- #
# Kernel 1: row-tiled dense  y = x @ W + b                                     #
# (used to hoist the LSTM input projection out of the recurrence)              #
# --------------------------------------------------------------------------- #
def dense_bias_kernel(x_ref, w_ref, b_ref, o_ref):
    o_ref[...] = (jnp.dot(x_ref[...], w_ref[...],
                          preferred_element_type=jnp.float32)
                  + b_ref[...])


def run_dense(x, w, b, tile_n=512):
    N, K = x.shape
    M = w.shape[1]
    tn = N if N <= tile_n else tile_n
    return pl.pallas_call(
        dense_bias_kernel,
        out_shape=jax.ShapeDtypeStruct((N, M), jnp.float32),
        grid=(pl.cdiv(N, tn),),
        in_specs=[
            pl.BlockSpec((tn, K), lambda i: (i, 0)),
            pl.BlockSpec((K, M), lambda i: (0, 0)),
            pl.BlockSpec((1, M), lambda i: (0, 0)),
        ],
        out_specs=pl.BlockSpec((tn, M), lambda i: (i, 0)),
        compiler_params=pltpu.CompilerParams(
            dimension_semantics=("parallel",),
            vmem_limit_bytes=_VMEM_LIMIT),
    )(x, w, b)


# --------------------------------------------------------------------------- #
# Kernel 2: LSTM recurrence, one grid step per direction (0=fwd, 1=bwd)        #
# x-projection xg already contains x@W_ih + b_ih + b_hh; only h@W_hh remains   #
# inside the time loop, which is a fully unrolled in-kernel fori_loop.         #
# --------------------------------------------------------------------------- #
def bilstm_kernel(xg_ref, len_ref, whh_ref, out_ref):
    d = pl.program_id(0)              # 0 = forward, 1 = backward
    T = xg_ref.shape[1]
    B = xg_ref.shape[2]
    H = whh_ref.shape[1]

    whh = whh_ref[0]                  # (H, 4H), read once, stays in vregs
    lengths = len_ref[...]            # (B, 1) int32
    is_bwd = d == 1

    def step(s, carry):
        h, c = carry
        # actual time index processed this step (reversed sweep for backward)
        t = jnp.where(is_bwd, T - 1 - s, s)
        gates = xg_ref[0, t] + jnp.dot(h, whh,
                                       preferred_element_type=jnp.float32)
        # PyTorch LSTM gate order [i, f, g, o]
        i_g = jax.nn.sigmoid(gates[:, 0 * H:1 * H])
        f_g = jax.nn.sigmoid(gates[:, 1 * H:2 * H])
        g_g = jnp.tanh(gates[:, 2 * H:3 * H])
        o_g = jax.nn.sigmoid(gates[:, 3 * H:4 * H])
        c_new = f_g * c + i_g * g_g
        h_new = o_g * jnp.tanh(c_new)
        # packed-sequence mask: padded steps neither update state nor emit
        mask = t < lengths            # (B, 1)
        c = jnp.where(mask, c_new, c)
        h = jnp.where(mask, h_new, h)
        out_ref[0, t] = jnp.where(mask, h_new, jnp.zeros_like(h_new))
        return h, c

    zeros = jnp.zeros((B, H), jnp.float32)
    lax.fori_loop(0, T, step, (zeros, zeros), unroll=True)


def run_bilstm(xg, lengths_2d, whh):
    _, T, B, H4 = xg.shape
    H = whh.shape[1]
    return pl.pallas_call(
        bilstm_kernel,
        out_shape=jax.ShapeDtypeStruct((2, T, B, H), jnp.float32),
        grid=(2,),
        in_specs=[
            pl.BlockSpec((1, T, B, H4), lambda d: (d, 0, 0, 0)),   # x-projection
            pl.BlockSpec((B, 1), lambda d: (0, 0)),                # lengths
            pl.BlockSpec((1, H, H4), lambda d: (d, 0, 0)),         # W_hh per dir
        ],
        out_specs=pl.BlockSpec((1, T, B, H), lambda d: (d, 0, 0, 0)),
        compiler_params=pltpu.CompilerParams(
            dimension_semantics=("parallel",),   # fwd/bwd independent (v7x: 2 TCs)
            vmem_limit_bytes=_VMEM_LIMIT),
    )(xg, lengths_2d, whh)


# --------------------------------------------------------------------------- #
# Kernel 3: emit Linear + transition broadcast, lane-dense flattened output    #
# out[n, i*O + j] = (rnn[n] @ W_emit)[j] + b[j] + trans[i, j]                  #
# --------------------------------------------------------------------------- #
def emit_crf_kernel(rnn_ref, w_ref, b_ref, transflat_ref, o_ref):
    O = w_ref.shape[1]
    e = (jnp.dot(rnn_ref[...], w_ref[...],
                 preferred_element_type=jnp.float32)
         + b_ref[...])                                   # (tn, O)
    # replicate emit scores O times along lanes -> (tn, O*O), then add trans
    e_rep = jnp.concatenate([e] * O, axis=-1)            # lane-dense store
    o_ref[...] = e_rep + transflat_ref[...]


def run_emit_crf(rnn_flat, w_emit_t, b_emit, trans_flat, tile_n=512):
    N, D2 = rnn_flat.shape
    O = w_emit_t.shape[1]
    tn = N if N <= tile_n else tile_n
    return pl.pallas_call(
        emit_crf_kernel,
        out_shape=jax.ShapeDtypeStruct((N, O * O), jnp.float32),
        grid=(pl.cdiv(N, tn),),
        in_specs=[
            pl.BlockSpec((tn, D2), lambda i: (i, 0)),
            pl.BlockSpec((D2, O), lambda i: (0, 0)),
            pl.BlockSpec((1, O), lambda i: (0, 0)),
            pl.BlockSpec((1, O * O), lambda i: (0, 0)),
        ],
        out_specs=pl.BlockSpec((tn, O * O), lambda i: (i, 0)),
        compiler_params=pltpu.CompilerParams(
            dimension_semantics=("parallel",),
            vmem_limit_bytes=_VMEM_LIMIT),
    )(rnn_flat, w_emit_t, b_emit, trans_flat)


# --------------------------------------------------------------------------- #
# Forward wrapper (glue in plain JAX: embedding gather, transposes, reshapes)  #
# --------------------------------------------------------------------------- #
def bilstm_crf_forward(src, lengths, params):
    B, T = src.shape
    E = params["emb"].shape[1]
    H = params["whh"].shape[1]
    O = params["w_emit_t"].shape[1]

    # TODO(synk): embedding gather stays in plain JAX (data-dependent row gather).
    embedding = params["emb"][src]                        # (B, T, E)
    x_flat = jnp.transpose(embedding, (1, 0, 2)).reshape(T * B, E)  # time-major

    # Hoisted input projection for BOTH directions in one MXU-friendly matmul:
    # columns [0:4H] -> forward gates, [4H:8H] -> backward gates (bias folded).
    xg_flat = run_dense(x_flat, params["wih"], params["b_ih"])      # (T*B, 8H)
    xg = xg_flat.reshape(T, B, 2, 4 * H).transpose(2, 0, 1, 3)      # (2, T, B, 4H)

    lengths_2d = lengths.astype(jnp.int32).reshape(B, 1)
    out = run_bilstm(xg, lengths_2d, params["whh"])                 # (2, T, B, H)

    # (B, T, 2H) with feature layout [fwd | bwd], as in PyTorch bidirectional LSTM
    rnn_out = jnp.transpose(out, (2, 1, 0, 3)).reshape(B, T, 2 * H)

    # pad_packed_sequence truncates to max(lengths); we keep the static T so the
    # forward is jit-able (padded tail rows just carry zero hidden states).
    rnn_flat = rnn_out.reshape(B * T, 2 * H)
    trans_flat = params["trans"].reshape(1, O * O)
    crf_flat = run_emit_crf(rnn_flat, params["w_emit_t"], params["b_emit"],
                            trans_flat)                             # (B*T, O*O)
    return crf_flat.reshape(B, T, O, O)


def init_params(key, vocab, emb_size, hidden_size, out_size):
    ks = jax.random.split(key, 12)
    H = hidden_size
    k_lstm = 1.0 / math.sqrt(H)
    k_emit = 1.0 / math.sqrt(2 * H)
    u = lambda k, shape, bnd: jax.random.uniform(k, shape, jnp.float32, -bnd, bnd)
    # Pre-transposed LSTM weights (E,4H)/(H,4H), PyTorch gate order [i,f,g,o].
    wih_f = u(ks[1], (emb_size, 4 * H), k_lstm)
    wih_b = u(ks[2], (emb_size, 4 * H), k_lstm)
    whh_f = u(ks[3], (H, 4 * H), k_lstm)
    whh_b = u(ks[4], (H, 4 * H), k_lstm)
    b_f = u(ks[5], (1, 4 * H), k_lstm) + u(ks[6], (1, 4 * H), k_lstm)  # b_ih+b_hh
    b_b = u(ks[7], (1, 4 * H), k_lstm) + u(ks[8], (1, 4 * H), k_lstm)
    return {
        "emb": jax.random.normal(ks[0], (vocab, emb_size), jnp.float32),
        "wih": jnp.concatenate([wih_f, wih_b], axis=1),     # (E, 8H) [fwd | bwd]
        "b_ih": jnp.concatenate([b_f, b_b], axis=1),        # (1, 8H)
        "whh": jnp.stack([whh_f, whh_b], axis=0),           # (2, H, 4H)
        # nn.Linear(2H, O): store W^T = (2H, O), bias drawn like PyTorch
        "w_emit_t": u(ks[9], (2 * H, out_size), k_emit),
        "b_emit": u(ks[10], (1, out_size), k_emit),
        # nn.Parameter(torch.ones(O, O) / O)
        "trans": jnp.ones((out_size, out_size), jnp.float32) / out_size,
    }


if __name__ == "__main__":
    B, T, E, H = 2, 8, 32, 32
    V = 20
    O = OUTPUT_DIC_SIZE

    key = jax.random.PRNGKey(0)
    k_param, k_src = jax.random.split(key)
    params = init_params(k_param, V, E, H, O)

    src = jax.random.randint(k_src, (B, T), 0, V, dtype=jnp.int32)
    # pack_padded_sequence expects lengths sorted descending
    lengths = jnp.array([8, 5], dtype=jnp.int32)

    fwd = jax.jit(bilstm_crf_forward)
    crf_scores = fwd(src, lengths, params)
    jax.block_until_ready(crf_scores)
    assert crf_scores.shape == (B, T, O, O)
    print("KERNEL_OK")
</pallas_src>

<mosaic_0001>
module attributes {stable_mosaic.version = 11 : i64} {
  func.func @bilstm_kernel(%arg0: i32, %arg1: memref<1x8x2x128xf32, #tpu.memory_space<vmem>>, %arg2: memref<2x1xi32, #tpu.memory_space<vmem>>, %arg3: memref<1x32x128xf32, #tpu.memory_space<vmem>>, %arg4: memref<1x8x2x32xf32, #tpu.memory_space<vmem>>) attributes {dimension_semantics = [#tpu.dimension_semantics<parallel>], iteration_bounds = array<i64: 2>, scalar_prefetch = 0 : i64, scratch_operands = 0 : i64, tpu.core_type = #tpu.core_type<tc>, window_params = [{transform_indices = @transform_0, window_bounds = array<i64: 1, 8, 2, 128>}, {pipeline_mode = #tpu.pipeline_mode<synchronous>, transform_indices = @transform_1, window_bounds = array<i64: 2, 1>}, {transform_indices = @transform_2, window_bounds = array<i64: 1, 32, 128>}, {transform_indices = @transform_3, window_bounds = array<i64: 1, 8, 2, 32>}]} {
    %c0 = arith.constant 0 : index
    %c0_0 = arith.constant 0 : index
    %c0_1 = arith.constant 0 : index
    %0 = vector.load %arg3[%c0, %c0_0, %c0_1] : memref<1x32x128xf32, #tpu.memory_space<vmem>>, vector<1x32x128xf32>
    %1 = vector.shape_cast %0 : vector<1x32x128xf32> to vector<32x128xf32>
    %c0_2 = arith.constant 0 : index
    %c0_3 = arith.constant 0 : index
    %2 = vector.load %arg2[%c0_2, %c0_3] : memref<2x1xi32, #tpu.memory_space<vmem>>, vector<2x1xi32>
    %c1_i32 = arith.constant 1 : i32
    %3 = arith.cmpi eq, %arg0, %c1_i32 : i32
    %cst = arith.constant 0.000000e+00 : f32
    %4 = vector.broadcast %cst : f32 to vector<2x32xf32>
    %c0_i32 = arith.constant 0 : i32
    %c7_i32 = arith.constant 7 : i32
    %5 = arith.subi %c7_i32, %c0_i32 : i32
    %6 = arith.select %3, %5, %c0_i32 : i32
    %c0_4 = arith.constant 0 : index
    %7 = arith.index_cast %6 : i32 to index
    %c0_5 = arith.constant 0 : index
    %c0_6 = arith.constant 0 : index
    %8 = vector.load %arg1[%c0_4, %7, %c0_5, %c0_6] : memref<1x8x2x128xf32, #tpu.memory_space<vmem>>, vector<1x1x2x128xf32>
    %9 = vector.shape_cast %8 : vector<1x1x2x128xf32> to vector<2x128xf32>
    %cst_7 = arith.constant dense<0.000000e+00> : vector<2x128xf32>
    %10 = tpu.matmul %4, %1, %cst_7 {dimension_numbers = #tpu.dot_dimension_numbers<[1], [0], [0], [1], [0, 0, 1, 1], [], []>} : vector<2x32xf32>, vector<32x128xf32>, vector<2x128xf32> -> vector<2x128xf32>
    %11 = arith.addf %9, %10 : vector<2x128xf32>
    %12 = vector.extract_strided_slice %11 {offsets = [0, 0], sizes = [2, 32], strides = [1, 1]} : vector<2x128xf32> to vector<2x32xf32>
    %13 = arith.negf %12 : vector<2x32xf32>
    %14 = math.exp %13 : vector<2x32xf32>
    %cst_8 = arith.constant 1.000000e+00 : f32
    %15 = vector.broadcast %cst_8 : f32 to vector<2x32xf32>
    %16 = arith.addf %15, %14 : vector<2x32xf32>
    %17 = arith.divf %15, %16 : vector<2x32xf32>
    %18 = vector.extract_strided_slice %11 {offsets = [0, 32], sizes = [2, 32], strides = [1, 1]} : vector<2x128xf32> to vector<2x32xf32>
    %19 = arith.negf %18 : vector<2x32xf32>
    %20 = math.exp %19 : vector<2x32xf32>
    %cst_9 = arith.constant 1.000000e+00 : f32
    %21 = vector.broadcast %cst_9 : f32 to vector<2x32xf32>
    %22 = arith.addf %21, %20 : vector<2x32xf32>
    %23 = arith.divf %21, %22 : vector<2x32xf32>
    %24 = vector.extract_strided_slice %11 {offsets = [0, 64], sizes = [2, 32], strides = [1, 1]} : vector<2x128xf32> to vector<2x32xf32>
    %25 = math.tanh %24 : vector<2x32xf32>
    %26 = vector.extract_strided_slice %11 {offsets = [0, 96], sizes = [2, 32], strides = [1, 1]} : vector<2x128xf32> to vector<2x32xf32>
    %27 = arith.negf %26 : vector<2x32xf32>
    %28 = math.exp %27 : vector<2x32xf32>
    %cst_10 = arith.constant 1.000000e+00 : f32
    %29 = vector.broadcast %cst_10 : f32 to vector<2x32xf32>
    %30 = arith.addf %29, %28 : vector<2x32xf32>
    %31 = arith.divf %29, %30 : vector<2x32xf32>
    %32 = arith.mulf %23, %4 : vector<2x32xf32>
    %33 = arith.mulf %17, %25 : vector<2x32xf32>
    %34 = arith.addf %32, %33 : vector<2x32xf32>
    %35 = math.tanh %34 : vector<2x32xf32>
    %36 = arith.mulf %31, %35 : vector<2x32xf32>
    %37 = vector.broadcast %6 : i32 to vector<2x1xi32>
    %38 = arith.cmpi slt, %37, %2 : vector<2x1xi32>
    %39 = vector.shape_cast %38 : vector<2x1xi1> to vector<2x1xi1>
    %40 = vector.broadcast %39 : vector<2x1xi1> to vector<2x32xi1>
    %41 = arith.select %40, %34, %4 : vector<2x32xi1>, vector<2x32xf32>
    %42 = vector.shape_cast %38 : vector<2x1xi1> to vector<2x1xi1>
    %43 = vector.broadcast %42 : vector<2x1xi1> to vector<2x32xi1>
    %44 = arith.select %43, %36, %4 : vector<2x32xi1>, vector<2x32xf32>
    %cst_11 = arith.constant 0.000000e+00 : f32
    %45 = vector.broadcast %cst_11 : f32 to vector<2x32xf32>
    %46 = vector.shape_cast %38 : vector<2x1xi1> to vector<2x1xi1>
    %47 = vector.broadcast %46 : vector<2x1xi1> to vector<2x32xi1>
    %48 = arith.select %47, %36, %45 : vector<2x32xi1>, vector<2x32xf32>
    %c0_12 = arith.constant 0 : index
    %49 = arith.index_cast %6 : i32 to index
    %c0_13 = arith.constant 0 : index
    %c0_14 = arith.constant 0 : index
    %50 = vector.load %arg4[%c0_12, %49, %c0_13, %c0_14] : memref<1x8x2x32xf32, #tpu.memory_space<vmem>>, vector<1x1x2x32xf32>
    %51 = vector.shape_cast %50 : vector<1x1x2x32xf32> to vector<2x32xf32>
    %52 = vector.shape_cast %48 : vector<2x32xf32> to vector<1x1x2x32xf32>
    tpu.vector_store %arg4[%c0_12, %49, %c0_13, %c0_14], %52 {strides = array<i32>} : memref<1x8x2x32xf32, #tpu.memory_space<vmem>>, vector<1x1x2x32xf32>,
    %c1_i32_15 = arith.constant 1 : i32
    %c7_i32_16 = arith.constant 7 : i32
    %53 = arith.subi %c7_i32_16, %c1_i32_15 : i32
    %54 = arith.select %3, %53, %c1_i32_15 : i32
    %c0_17 = arith.constant 0 : index
    %55 = arith.index_cast %54 : i32 to index
    %c0_18 = arith.constant 0 : index
    %c0_19 = arith.constant 0 : index
    %56 = vector.load %arg1[%c0_17, %55, %c0_18, %c0_19] : memref<1x8x2x128xf32, #tpu.memory_space<vmem>>, vector<1x1x2x128xf32>
    %57 = vector.shape_cast %56 : vector<1x1x2x128xf32> to vector<2x128xf32>
    %cst_20 = arith.constant dense<0.000000e+00> : vector<2x128xf32>
    %58 = tpu.matmul %44, %1, %cst_20 {dimension_numbers = #tpu.dot_dimension_numbers<[1], [0], [0], [1], [0, 0, 1, 1], [], []>} : vector<2x32xf32>, vector<32x128xf32>, vector<2x128xf32> -> vector<2x128xf32>
    %59 = arith.addf %57, %58 : vector<2x128xf32>
    %60 = vector.extract_strided_slice %59 {offsets = [0, 0], sizes = [2, 32], strides = [1, 1]} : vector<2x128xf32> to vector<2x32xf32>
    %61 = arith.negf %60 : vector<2x32xf32>
    %62 = math.exp %61 : vector<2x32xf32>
    %cst_21 = arith.constant 1.000000e+00 : f32
    %63 = vector.broadcast %cst_21 : f32 to vector<2x32xf32>
    %64 = arith.addf %63, %62 : vector<2x32xf32>
    %65 = arith.divf %63, %64 : vector<2x32xf32>
    %66 = vector.extract_strided_slice %59 {offsets = [0, 32], sizes = [2, 32], strides = [1, 1]} : vector<2x128xf32> to vector<2x32xf32>
    %67 = arith.negf %66 : vector<2x32xf32>
    %68 = math.exp %67 : vector<2x32xf32>
    %cst_22 = arith.constant 1.000000e+00 : f32
    %69 = vector.broadcast %cst_22 : f32 to vector<2x32xf32>
    %70 = arith.addf %69, %68 : vector<2x32xf32>
    %71 = arith.divf %69, %70 : vector<2x32xf32>
    %72 = vector.extract_strided_slice %59 {offsets = [0, 64], sizes = [2, 32], strides = [1, 1]} : vector<2x128xf32> to vector<2x32xf32>
    %73 = math.tanh %72 : vector<2x32xf32>
    %74 = vector.extract_strided_slice %59 {offsets = [0, 96], sizes = [2, 32], strides = [1, 1]} : vector<2x128xf32> to vector<2x32xf32>
    %75 = arith.negf %74 : vector<2x32xf32>
    %76 = math.exp %75 : vector<2x32xf32>
    %cst_23 = arith.constant 1.000000e+00 : f32
    %77 = vector.broadcast %cst_23 : f32 to vector<2x32xf32>
    %78 = arith.addf %77, %76 : vector<2x32xf32>
    %79 = arith.divf %77, %78 : vector<2x32xf32>
    %80 = arith.mulf %71, %41 : vector<2x32xf32>
    %81 = arith.mulf %65, %73 : vector<2x32xf32>
    %82 = arith.addf %80, %81 : vector<2x32xf32>
    %83 = math.tanh %82 : vector<2x32xf32>
    %84 = arith.mulf %79, %83 : vector<2x32xf32>
    %85 = vector.broadcast %54 : i32 to vector<2x1xi32>
    %86 = arith.cmpi slt, %85, %2 : vector<2x1xi32>
    %87 = vector.shape_cast %86 : vector<2x1xi1> to vector<2x1xi1>
    %88 = vector.broadcast %87 : vector<2x1xi1> to vector<2x32xi1>
    %89 = arith.select %88, %82, %41 : vector<2x32xi1>, vector<2x32xf32>
    %90 = vector.shape_cast %86 : vector<2x1xi1> to vector<2x1xi1>
    %91 = vector.broadcast %90 : vector<2x1xi1> to vector<2x32xi1>
    %92 = arith.select %91, %84, %44 : vector<2x32xi1>, vector<2x32xf32>
    %cst_24 = arith.constant 0.000000e+00 : f32
    %93 = vector.broadcast %cst_24 : f32 to vector<2x32xf32>
    %94 = vector.shape_cast %86 : vector<2x1xi1> to vector<2x1xi1>
    %95 = vector.broadcast %94 : vector<2x1xi1> to vector<2x32xi1>
    %96 = arith.select %95, %84, %93 : vector<2x32xi1>, vector<2x32xf32>
    %c0_25 = arith.constant 0 : index
    %97 = arith.index_cast %54 : i32 to index
    %c0_26 = arith.constant 0 : index
    %c0_27 = arith.constant 0 : index
    %98 = vector.load %arg4[%c0_25, %97, %c0_26, %c0_27] : memref<1x8x2x32xf32, #tpu.memory_space<vmem>>, vector<1x1x2x32xf32>
    %99 = vector.shape_cast %98 : vector<1x1x2x32xf32> to vector<2x32xf32>
    %100 = vector.shape_cast %96 : vector<2x32xf32> to vector<1x1x2x32xf32>
    tpu.vector_store %arg4[%c0_25, %97, %c0_26, %c0_27], %100 {strides = array<i32>} : memref<1x8x2x32xf32, #tpu.memory_space<vmem>>, vector<1x1x2x32xf32>,
    %c2_i32 = arith.constant 2 : i32
    %c7_i32_28 = arith.constant 7 : i32
    %101 = arith.subi %c7_i32_28, %c2_i32 : i32
    %102 = arith.select %3, %101, %c2_i32 : i32
    %c0_29 = arith.constant 0 : index
    %103 = arith.index_cast %102 : i32 to index
    %c0_30 = arith.constant 0 : index
    %c0_31 = arith.constant 0 : index
    %104 = vector.load %arg1[%c0_29, %103, %c0_30, %c0_31] : memref<1x8x2x128xf32, #tpu.memory_space<vmem>>, vector<1x1x2x128xf32>
    %105 = vector.shape_cast %104 : vector<1x1x2x128xf32> to vector<2x128xf32>
    %cst_32 = arith.constant dense<0.000000e+00> : vector<2x128xf32>
    %106 = tpu.matmul %92, %1, %cst_32 {dimension_numbers = #tpu.dot_dimension_numbers<[1], [0], [0], [1], [0, 0, 1, 1], [], []>} : vector<2x32xf32>, vector<32x128xf32>, vector<2x128xf32> -> vector<2x128xf32>
    %107 = arith.addf %105, %106 : vector<2x128xf32>
    %108 = vector.extract_strided_slice %107 {offsets = [0, 0], sizes = [2, 32], strides = [1, 1]} : vector<2x128xf32> to vector<2x32xf32>
    %109 = arith.negf %108 : vector<2x32xf32>
    %110 = math.exp %109 : vector<2x32xf32>
    %cst_33 = arith.constant 1.000000e+00 : f32
    %111 = vector.broadcast %cst_33 : f32 to vector<2x32xf32>
    %112 = arith.addf %111, %110 : vector<2x32xf32>
    %113 = arith.divf %111, %112 : vector<2x32xf32>
    %114 = vector.extract_strided_slice %107 {offsets = [0, 32], sizes = [2, 32], strides = [1, 1]} : vector<2x128xf32> to vector<2x32xf32>
    %115 = arith.negf %114 : vector<2x32xf32>
    %116 = math.exp %115 : vector<2x32xf32>
    %cst_34 = arith.constant 1.000000e+00 : f32
    %117 = vector.broadcast %cst_34 : f32 to vector<2x32xf32>
    %118 = arith.addf %117, %116 : vector<2x32xf32>
    %119 = arith.divf %117, %118 : vector<2x32xf32>
    %120 = vector.extract_strided_slice %107 {offsets = [0, 64], sizes = [2, 32], strides = [1, 1]} : vector<2x128xf32> to vector<2x32xf32>
    %121 = math.tanh %120 : vector<2x32xf32>
    %122 = vector.extract_strided_slice %107 {offsets = [0, 96], sizes = [2, 32], strides = [1, 1]} : vector<2x128xf32> to vector<2x32xf32>
    %123 = arith.negf %122 : vector<2x32xf32>
    %124 = math.exp %123 : vector<2x32xf32>
    %cst_35 = arith.constant 1.000000e+00 : f32
    %125 = vector.broadcast %cst_35 : f32 to vector<2x32xf32>
    %126 = arith.addf %125, %124 : vector<2x32xf32>
    %127 = arith.divf %125, %126 : vector<2x32xf32>
    %128 = arith.mulf %119, %89 : vector<2x32xf32>
    %129 = arith.mulf %113, %121 : vector<2x32xf32>
    %130 = arith.addf %128, %129 : vector<2x32xf32>
    %131 = math.tanh %130 : vector<2x32xf32>
    %132 = arith.mulf %127, %131 : vector<2x32xf32>
    %133 = vector.broadcast %102 : i32 to vector<2x1xi32>
    %134 = arith.cmpi slt, %133, %2 : vector<2x1xi32>
    %135 = vector.shape_cast %134 : vector<2x1xi1> to vector<2x1xi1>
    %136 = vector.broadcast %135 : vector<2x1xi1> to vector<2x32xi1>
    %137 = arith.select %136, %130, %89 : vector<2x32xi1>, vector<2x32xf32>
    %138 = vector.shape_cast %134 : vector<2x1xi1> to vector<2x1xi1>
    %139 = vector.broadcast %138 : vector<2x1xi1> to vector<2x32xi1>
    %140 = arith.select %139, %132, %92 : vector<2x32xi1>, vector<2x32xf32>
    %cst_36 = arith.constant 0.000000e+00 : f32
    %141 = vector.broadcast %cst_36 : f32 to vector<2x32xf32>
    %142 = vector.shape_cast %134 : vector<2x1xi1> to vector<2x1xi1>
    %143 = vector.broadcast %142 : vector<2x1xi1> to vector<2x32xi1>
    %144 = arith.select %143, %132, %141 : vector<2x32xi1>, vector<2x32xf32>
    %c0_37 = arith.constant 0 : index
    %145 = arith.index_cast %102 : i32 to index
    %c0_38 = arith.constant 0 : index
    %c0_39 = arith.constant 0 : index
    %146 = vector.load %arg4[%c0_37, %145, %c0_38, %c0_39] : memref<1x8x2x32xf32, #tpu.memory_space<vmem>>, vector<1x1x2x32xf32>
    %147 = vector.shape_cast %146 : vector<1x1x2x32xf32> to vector<2x32xf32>
    %148 = vector.shape_cast %144 : vector<2x32xf32> to vector<1x1x2x32xf32>
    tpu.vector_store %arg4[%c0_37, %145, %c0_38, %c0_39], %148 {strides = array<i32>} : memref<1x8x2x32xf32, #tpu.memory_space<vmem>>, vector<1x1x2x32xf32>,
    %c3_i32 = arith.constant 3 : i32
    %c7_i32_40 = arith.constant 7 : i32
    %149 = arith.subi %c7_i32_40, %c3_i32 : i32
    %150 = arith.select %3, %149, %c3_i32 : i32
    %c0_41 = arith.constant 0 : index
    %151 = arith.index_cast %150 : i32 to index
    %c0_42 = arith.constant 0 : index
    %c0_43 = arith.constant 0 : index
    %152 = vector.load %arg1[%c0_41, %151, %c0_42, %c0_43] : memref<1x8x2x128xf32, #tpu.memory_space<vmem>>, vector<1x1x2x128xf32>
    %153 = vector.shape_cast %152 : vector<1x1x2x128xf32> to vector<2x128xf32>
    %cst_44 = arith.constant dense<0.000000e+00> : vector<2x128xf32>
    %154 = tpu.matmul %140, %1, %cst_44 {dimension_numbers = #tpu.dot_dimension_numbers<[1], [0], [0], [1], [0, 0, 1, 1], [], []>} : vector<2x32xf32>, vector<32x128xf32>, vector<2x128xf32> -> vector<2x128xf32>
    %155 = arith.addf %153, %154 : vector<2x128xf32>
    %156 = vector.extract_strided_slice %155 {offsets = [0, 0], sizes = [2, 32], strides = [1, 1]} : vector<2x128xf32> to vector<2x32xf32>
    %157 = arith.negf %156 : vector<2x32xf32>
    %158 = math.exp %157 : vector<2x32xf32>
    %cst_45 = arith.constant 1.000000e+00 : f32
    %159 = vector.broadcast %cst_45 : f32 to vector<2x32xf32>
    %160 = arith.addf %159, %158 : vector<2x32xf32>
    %161 = arith.divf %159, %160 : vector<2x32xf32>
    %162 = vector.extract_strided_slice %155 {offsets = [0, 32], sizes = [2, 32], strides = [1, 1]} : vector<2x128xf32> to vector<2x32xf32>
    %163 = arith.negf %162 : vector<2x32xf32>
    %164 = math.exp %163 : vector<2x32xf32>
    %cst_46 = arith.constant 1.000000e+00 : f32
    %165 = vector.broadcast %cst_46 : f32 to vector<2x32xf32>
    %166 = arith.addf %165, %164 : vector<2x32xf32>
    %167 = arith.divf %165, %166 : vector<2x32xf32>
    %168 = vector.extract_strided_slice %155 {offsets = [0, 64], sizes = [2, 32], strides = [1, 1]} : vector<2x128xf32> to vector<2x32xf32>
    %169 = math.tanh %168 : vector<2x32xf32>
    %170 = vector.extract_strided_slice %155 {offsets = [0, 96], sizes = [2, 32], strides = [1, 1]} : vector<2x128xf32> to vector<2x32xf32>
    %171 = arith.negf %170 : vector<2x32xf32>
    %172 = math.exp %171 : vector<2x32xf32>
    %cst_47 = arith.constant 1.000000e+00 : f32
    %173 = vector.broadcast %cst_47 : f32 to vector<2x32xf32>
    %174 = arith.addf %173, %172 : vector<2x32xf32>
    %175 = arith.divf %173, %174 : vector<2x32xf32>
    %176 = arith.mulf %167, %137 : vector<2x32xf32>
    %177 = arith.mulf %161, %169 : vector<2x32xf32>
    %178 = arith.addf %176, %177 : vector<2x32xf32>
    %179 = math.tanh %178 : vector<2x32xf32>
    %180 = arith.mulf %175, %179 : vector<2x32xf32>
    %181 = vector.broadcast %150 : i32 to vector<2x1xi32>
    %182 = arith.cmpi slt, %181, %2 : vector<2x1xi32>
    %183 = vector.shape_cast %182 : vector<2x1xi1> to vector<2x1xi1>
    %184 = vector.broadcast %183 : vector<2x1xi1> to vector<2x32xi1>
    %185 = arith.select %184, %178, %137 : vector<2x32xi1>, vector<2x32xf32>
    %186 = vector.shape_cast %182 : vector<2x1xi1> to vector<2x1xi1>
    %187 = vector.broadcast %186 : vector<2x1xi1> to vector<2x32xi1>
    %188 = arith.select %187, %180, %140 : vector<2x32xi1>, vector<2x32xf32>
    %cst_48 = arith.constant 0.000000e+00 : f32
    %189 = vector.broadcast %cst_48 : f32 to vector<2x32xf32>
    %190 = vector.shape_cast %182 : vector<2x1xi1> to vector<2x1xi1>
    %191 = vector.broadcast %190 : vector<2x1xi1> to vector<2x32xi1>
    %192 = arith.select %191, %180, %189 : vector<2x32xi1>, vector<2x32xf32>
    %c0_49 = arith.constant 0 : index
    %193 = arith.index_cast %150 : i32 to index
    %c0_50 = arith.constant 0 : index
    %c0_51 = arith.constant 0 : index
    %194 = vector.load %arg4[%c0_49, %193, %c0_50, %c0_51] : memref<1x8x2x32xf32, #tpu.memory_space<vmem>>, vector<1x1x2x32xf32>
    %195 = vector.shape_cast %194 : vector<1x1x2x32xf32> to vector<2x32xf32>
    %196 = vector.shape_cast %192 : vector<2x32xf32> to vector<1x1x2x32xf32>
    tpu.vector_store %arg4[%c0_49, %193, %c0_50, %c0_51], %196 {strides = array<i32>} : memref<1x8x2x32xf32, #tpu.memory_space<vmem>>, vector<1x1x2x32xf32>,
    %c4_i32 = arith.constant 4 : i32
    %c7_i32_52 = arith.constant 7 : i32
    %197 = arith.subi %c7_i32_52, %c4_i32 : i32
    %198 = arith.select %3, %197, %c4_i32 : i32
    %c0_53 = arith.constant 0 : index
    %199 = arith.index_cast %198 : i32 to index
    %c0_54 = arith.constant 0 : index
    %c0_55 = arith.constant 0 : index
    %200 = vector.load %arg1[%c0_53, %199, %c0_54, %c0_55] : memref<1x8x2x128xf32, #tpu.memory_space<vmem>>, vector<1x1x2x128xf32>
    %201 = vector.shape_cast %200 : vector<1x1x2x128xf32> to vector<2x128xf32>
    %cst_56 = arith.constant dense<0.000000e+00> : vector<2x128xf32>
    %202 = tpu.matmul %188, %1, %cst_56 {dimension_numbers = #tpu.dot_dimension_numbers<[1], [0], [0], [1], [0, 0, 1, 1], [], []>} : vector<2x32xf32>, vector<32x128xf32>, vector<2x128xf32> -> vector<2x128xf32>
    %203 = arith.addf %201, %202 : vector<2x128xf32>
    %204 = vector.extract_strided_slice %203 {offsets = [0, 0], sizes = [2, 32], strides = [1, 1]} : vector<2x128xf32> to vector<2x32xf32>
    %205 = arith.negf %204 : vector<2x32xf32>
    %206 = math.exp %205 : vector<2x32xf32>
    %cst_57 = arith.constant 1.000000e+00 : f32
    %207 = vector.broadcast %cst_57 : f32 to vector<2x32xf32>
    %208 = arith.addf %207, %206 : vector<2x32xf32>
    %209 = arith.divf %207, %208 : vector<2x32xf32>
    %210 = vector.extract_strided_slice %203 {offsets = [0, 32], sizes = [2, 32], strides = [1, 1]} : vector<2x128xf32> to vector<2x32xf32>
    %211 = arith.negf %210 : vector<2x32xf32>
    %212 = math.exp %211 : vector<2x32xf32>
    %cst_58 = arith.constant 1.000000e+00 : f32
    %213 = vector.broadcast %cst_58 : f32 to vector<2x32xf32>
    %214 = arith.addf %213, %212 : vector<2x32xf32>
    %215 = arith.divf %213, %214 : vector<2x32xf32>
    %216 = vector.extract_strided_slice %203 {offsets = [0, 64], sizes = [2, 32], strides = [1, 1]} : vector<2x128xf32> to vector<2x32xf32>
    %217 = math.tanh %216 : vector<2x32xf32>
    %218 = vector.extract_strided_slice %203 {offsets = [0, 96], sizes = [2, 32], strides = [1, 1]} : vector<2x128xf32> to vector<2x32xf32>
    %219 = arith.negf %218 : vector<2x32xf32>
    %220 = math.exp %219 : vector<2x32xf32>
    %cst_59 = arith.constant 1.000000e+00 : f32
    %221 = vector.broadcast %cst_59 : f32 to vector<2x32xf32>
    %222 = arith.addf %221, %220 : vector<2x32xf32>
    %223 = arith.divf %221, %222 : vector<2x32xf32>
    %224 = arith.mulf %215, %185 : vector<2x32xf32>
    %225 = arith.mulf %209, %217 : vector<2x32xf32>
    %226 = arith.addf %224, %225 : vector<2x32xf32>
    %227 = math.tanh %226 : vector<2x32xf32>
    %228 = arith.mulf %223, %227 : vector<2x32xf32>
    %229 = vector.broadcast %198 : i32 to vector<2x1xi32>
    %230 = arith.cmpi slt, %229, %2 : vector<2x1xi32>
    %231 = vector.shape_cast %230 : vector<2x1xi1> to vector<2x1xi1>
    %232 = vector.broadcast %231 : vector<2x1xi1> to vector<2x32xi1>
    %233 = arith.select %232, %226, %185 : vector<2x32xi1>, vector<2x32xf32>
    %234 = vector.shape_cast %230 : vector<2x1xi1> to vector<2x1xi1>
    %235 = vector.broadcast %234 : vector<2x1xi1> to vector<2x32xi1>
    %236 = arith.select %235, %228, %188 : vector<2x32xi1>, vector<2x32xf32>
    %cst_60 = arith.constant 0.000000e+00 : f32
    %237 = vector.broadcast %cst_60 : f32 to vector<2x32xf32>
    %238 = vector.shape_cast %230 : vector<2x1xi1> to vector<2x1xi1>
    %239 = vector.broadcast %238 : vector<2x1xi1> to vector<2x32xi1>
    %240 = arith.select %239, %228, %237 : vector<2x32xi1>, vector<2x32xf32>
    %c0_61 = arith.constant 0 : index
    %241 = arith.index_cast %198 : i32 to index
    %c0_62 = arith.constant 0 : index
    %c0_63 = arith.constant 0 : index
    %242 = vector.load %arg4[%c0_61, %241, %c0_62, %c0_63] : memref<1x8x2x32xf32, #tpu.memory_space<vmem>>, vector<1x1x2x32xf32>
    %243 = vector.shape_cast %242 : vector<1x1x2x32xf32> to vector<2x32xf32>
    %244 = vector.shape_cast %240 : vector<2x32xf32> to vector<1x1x2x32xf32>
    tpu.vector_store %arg4[%c0_61, %241, %c0_62, %c0_63], %244 {strides = array<i32>} : memref<1x8x2x32xf32, #tpu.memory_space<vmem>>, vector<1x1x2x32xf32>,
    %c5_i32 = arith.constant 5 : i32
    %c7_i32_64 = arith.constant 7 : i32
    %245 = arith.subi %c7_i32_64, %c5_i32 : i32
    %246 = arith.select %3, %245, %c5_i32 : i32
    %c0_65 = arith.constant 0 : index
    %247 = arith.index_cast %246 : i32 to index
    %c0_66 = arith.constant 0 : index
    %c0_67 = arith.constant 0 : index
    %248 = vector.load %arg1[%c0_65, %247, %c0_66, %c0_67] : memref<1x8x2x128xf32, #tpu.memory_space<vmem>>, vector<1x1x2x128xf32>
    %249 = vector.shape_cast %248 : vector<1x1x2x128xf32> to vector<2x128xf32>
    %cst_68 = arith.constant dense<0.000000e+00> : vector<2x128xf32>
    %250 = tpu.matmul %236, %1, %cst_68 {dimension_numbers = #tpu.dot_dimension_numbers<[1], [0], [0], [1], [0, 0, 1, 1], [], []>} : vector<2x32xf32>, vector<32x128xf32>, vector<2x128xf32> -> vector<2x128xf32>
    %251 = arith.addf %249, %250 : vector<2x128xf32>
    %252 = vector.extract_strided_slice %251 {offsets = [0, 0], sizes = [2, 32], strides = [1, 1]} : vector<2x128xf32> to vector<2x32xf32>
    %253 = arith.negf %252 : vector<2x32xf32>
    %254 = math.exp %253 : vector<2x32xf32>
    %cst_69 = arith.constant 1.000000e+00 : f32
    %255 = vector.broadcast %cst_69 : f32 to vector<2x32xf32>
    %256 = arith.addf %255, %254 : vector<2x32xf32>
    %257 = arith.divf %255, %256 : vector<2x32xf32>
    %258 = vector.extract_strided_slice %251 {offsets = [0, 32], sizes = [2, 32], strides = [1, 1]} : vector<2x128xf32> to vector<2x32xf32>
    %259 = arith.negf %258 : vector<2x32xf32>
    %260 = math.exp %259 : vector<2x32xf32>
    %cst_70 = arith.constant 1.000000e+00 : f32
    %261 = vector.broadcast %cst_70 : f32 to vector<2x32xf32>
    %262 = arith.addf %261, %260 : vector<2x32xf32>
    %263 = arith.divf %261, %262 : vector<2x32xf32>
    %264 = vector.extract_strided_slice %251 {offsets = [0, 64], sizes = [2, 32], strides = [1, 1]} : vector<2x128xf32> to vector<2x32xf32>
    %265 = math.tanh %264 : vector<2x32xf32>
    %266 = vector.extract_strided_slice %251 {offsets = [0, 96], sizes = [2, 32], strides = [1, 1]} : vector<2x128xf32> to vector<2x32xf32>
    %267 = arith.negf %266 : vector<2x32xf32>
    %268 = math.exp %267 : vector<2x32xf32>
    %cst_71 = arith.constant 1.000000e+00 : f32
    %269 = vector.broadcast %cst_71 : f32 to vector<2x32xf32>
    %270 = arith.addf %269, %268 : vector<2x32xf32>
    %271 = arith.divf %269, %270 : vector<2x32xf32>
    %272 = arith.mulf %263, %233 : vector<2x32xf32>
    %273 = arith.mulf %257, %265 : vector<2x32xf32>
    %274 = arith.addf %272, %273 : vector<2x32xf32>
    %275 = math.tanh %274 : vector<2x32xf32>
    %276 = arith.mulf %271, %275 : vector<2x32xf32>
    %277 = vector.broadcast %246 : i32 to vector<2x1xi32>
    %278 = arith.cmpi slt, %277, %2 : vector<2x1xi32>
    %279 = vector.shape_cast %278 : vector<2x1xi1> to vector<2x1xi1>
    %280 = vector.broadcast %279 : vector<2x1xi1> to vector<2x32xi1>
    %281 = arith.select %280, %274, %233 : vector<2x32xi1>, vector<2x32xf32>
    %282 = vector.shape_cast %278 : vector<2x1xi1> to vector<2x1xi1>
    %283 = vector.broadcast %282 : vector<2x1xi1> to vector<2x32xi1>
    %284 = arith.select %283, %276, %236 : vector<2x32xi1>, vector<2x32xf32>
    %cst_72 = arith.constant 0.000000e+00 : f32
    %285 = vector.broadcast %cst_72 : f32 to vector<2x32xf32>
    %286 = vector.shape_cast %278 : vector<2x1xi1> to vector<2x1xi1>
    %287 = vector.broadcast %286 : vector<2x1xi1> to vector<2x32xi1>
    %288 = arith.select %287, %276, %285 : vector<2x32xi1>, vector<2x32xf32>
    %c0_73 = arith.constant 0 : index
    %289 = arith.index_cast %246 : i32 to index
    %c0_74 = arith.constant 0 : index
    %c0_75 = arith.constant 0 : index
    %290 = vector.load %arg4[%c0_73, %289, %c0_74, %c0_75] : memref<1x8x2x32xf32, #tpu.memory_space<vmem>>, vector<1x1x2x32xf32>
    %291 = vector.shape_cast %290 : vector<1x1x2x32xf32> to vector<2x32xf32>
    %292 = vector.shape_cast %288 : vector<2x32xf32> to vector<1x1x2x32xf32>
    tpu.vector_store %arg4[%c0_73, %289, %c0_74, %c0_75], %292 {strides = array<i32>} : memref<1x8x2x32xf32, #tpu.memory_space<vmem>>, vector<1x1x2x32xf32>,
    %c6_i32 = arith.constant 6 : i32
    %c7_i32_76 = arith.constant 7 : i32
    %293 = arith.subi %c7_i32_76, %c6_i32 : i32
    %294 = arith.select %3, %293, %c6_i32 : i32
    %c0_77 = arith.constant 0 : index
    %295 = arith.index_cast %294 : i32 to index
    %c0_78 = arith.constant 0 : index
    %c0_79 = arith.constant 0 : index
    %296 = vector.load %arg1[%c0_77, %295, %c0_78, %c0_79] : memref<1x8x2x128xf32, #tpu.memory_space<vmem>>, vector<1x1x2x128xf32>
    %297 = vector.shape_cast %296 : vector<1x1x2x128xf32> to vector<2x128xf32>
    %cst_80 = arith.constant dense<0.000000e+00> : vector<2x128xf32>
    %298 = tpu.matmul %284, %1, %cst_80 {dimension_numbers = #tpu.dot_dimension_numbers<[1], [0], [0], [1], [0, 0, 1, 1], [], []>} : vector<2x32xf32>, vector<32x128xf32>, vector<2x128xf32> -> vector<2x128xf32>
    %299 = arith.addf %297, %298 : vector<2x128xf32>
    %300 = vector.extract_strided_slice %299 {offsets = [0, 0], sizes = [2, 32], strides = [1, 1]} : vector<2x128xf32> to vector<2x32xf32>
    %301 = arith.negf %300 : vector<2x32xf32>
    %302 = math.exp %301 : vector<2x32xf32>
    %cst_81 = arith.constant 1.000000e+00 : f32
    %303 = vector.broadcast %cst_81 : f32 to vector<2x32xf32>
    %304 = arith.addf %303, %302 : vector<2x32xf32>
    %305 = arith.divf %303, %304 : vector<2x32xf32>
    %306 = vector.extract_strided_slice %299 {offsets = [0, 32], sizes = [2, 32], strides = [1, 1]} : vector<2x128xf32> to vector<2x32xf32>
    %307 = arith.negf %306 : vector<2x32xf32>
    %308 = math.exp %307 : vector<2x32xf32>
    %cst_82 = arith.constant 1.000000e+00 : f32
    %309 = vector.broadcast %cst_82 : f32 to vector<2x32xf32>
    %310 = arith.addf %309, %308 : vector<2x32xf32>
    %311 = arith.divf %309, %310 : vector<2x32xf32>
    %312 = vector.extract_strided_slice %299 {offsets = [0, 64], sizes = [2, 32], strides = [1, 1]} : vector<2x128xf32> to vector<2x32xf32>
    %313 = math.tanh %312 : vector<2x32xf32>
    %314 = vector.extract_strided_slice %299 {offsets = [0, 96], sizes = [2, 32], strides = [1, 1]} : vector<2x128xf32> to vector<2x32xf32>
    %315 = arith.negf %314 : vector<2x32xf32>
    %316 = math.exp %315 : vector<2x32xf32>
    %cst_83 = arith.constant 1.000000e+00 : f32
    %317 = vector.broadcast %cst_83 : f32 to vector<2x32xf32>
    %318 = arith.addf %317, %316 : vector<2x32xf32>
    %319 = arith.divf %317, %318 : vector<2x32xf32>
    %320 = arith.mulf %311, %281 : vector<2x32xf32>
    %321 = arith.mulf %305, %313 : vector<2x32xf32>
    %322 = arith.addf %320, %321 : vector<2x32xf32>
    %323 = math.tanh %322 : vector<2x32xf32>
    %324 = arith.mulf %319, %323 : vector<2x32xf32>
    %325 = vector.broadcast %294 : i32 to vector<2x1xi32>
    %326 = arith.cmpi slt, %325, %2 : vector<2x1xi32>
    %327 = vector.shape_cast %326 : vector<2x1xi1> to vector<2x1xi1>
    %328 = vector.broadcast %327 : vector<2x1xi1> to vector<2x32xi1>
    %329 = arith.select %328, %322, %281 : vector<2x32xi1>, vector<2x32xf32>
    %330 = vector.shape_cast %326 : vector<2x1xi1> to vector<2x1xi1>
    %331 = vector.broadcast %330 : vector<2x1xi1> to vector<2x32xi1>
    %332 = arith.select %331, %324, %284 : vector<2x32xi1>, vector<2x32xf32>
    %cst_84 = arith.constant 0.000000e+00 : f32
    %333 = vector.broadcast %cst_84 : f32 to vector<2x32xf32>
    %334 = vector.shape_cast %326 : vector<2x1xi1> to vector<2x1xi1>
    %335 = vector.broadcast %334 : vector<2x1xi1> to vector<2x32xi1>
    %336 = arith.select %335, %324, %333 : vector<2x32xi1>, vector<2x32xf32>
    %c0_85 = arith.constant 0 : index
    %337 = arith.index_cast %294 : i32 to index
    %c0_86 = arith.constant 0 : index
    %c0_87 = arith.constant 0 : index
    %338 = vector.load %arg4[%c0_85, %337, %c0_86, %c0_87] : memref<1x8x2x32xf32, #tpu.memory_space<vmem>>, vector<1x1x2x32xf32>
    %339 = vector.shape_cast %338 : vector<1x1x2x32xf32> to vector<2x32xf32>
    %340 = vector.shape_cast %336 : vector<2x32xf32> to vector<1x1x2x32xf32>
    tpu.vector_store %arg4[%c0_85, %337, %c0_86, %c0_87], %340 {strides = array<i32>} : memref<1x8x2x32xf32, #tpu.memory_space<vmem>>, vector<1x1x2x32xf32>,
    %c7_i32_88 = arith.constant 7 : i32
    %c7_i32_89 = arith.constant 7 : i32
    %341 = arith.subi %c7_i32_89, %c7_i32_88 : i32
    %342 = arith.select %3, %341, %c7_i32_88 : i32
    %c0_90 = arith.constant 0 : index
    %343 = arith.index_cast %342 : i32 to index
    %c0_91 = arith.constant 0 : index
    %c0_92 = arith.constant 0 : index
    %344 = vector.load %arg1[%c0_90, %343, %c0_91, %c0_92] : memref<1x8x2x128xf32, #tpu.memory_space<vmem>>, vector<1x1x2x128xf32>
    %345 = vector.shape_cast %344 : vector<1x1x2x128xf32> to vector<2x128xf32>
    %cst_93 = arith.constant dense<0.000000e+00> : vector<2x128xf32>
    %346 = tpu.matmul %332, %1, %cst_93 {dimension_numbers = #tpu.dot_dimension_numbers<[1], [0], [0], [1], [0, 0, 1, 1], [], []>} : vector<2x32xf32>, vector<32x128xf32>, vector<2x128xf32> -> vector<2x128xf32>
    %347 = arith.addf %345, %346 : vector<2x128xf32>
    %348 = vector.extract_strided_slice %347 {offsets = [0, 0], sizes = [2, 32], strides = [1, 1]} : vector<2x128xf32> to vector<2x32xf32>
    %349 = arith.negf %348 : vector<2x32xf32>
    %350 = math.exp %349 : vector<2x32xf32>
    %cst_94 = arith.constant 1.000000e+00 : f32
    %351 = vector.broadcast %cst_94 : f32 to vector<2x32xf32>
    %352 = arith.addf %351, %350 : vector<2x32xf32>
    %353 = arith.divf %351, %352 : vector<2x32xf32>
    %354 = vector.extract_strided_slice %347 {offsets = [0, 32], sizes = [2, 32], strides = [1, 1]} : vector<2x128xf32> to vector<2x32xf32>
    %355 = arith.negf %354 : vector<2x32xf32>
    %356 = math.exp %355 : vector<2x32xf32>
    %cst_95 = arith.constant 1.000000e+00 : f32
    %357 = vector.broadcast %cst_95 : f32 to vector<2x32xf32>
    %358 = arith.addf %357, %356 : vector<2x32xf32>
    %359 = arith.divf %357, %358 : vector<2x32xf32>
    %360 = vector.extract_strided_slice %347 {offsets = [0, 64], sizes = [2, 32], strides = [1, 1]} : vector<2x128xf32> to vector<2x32xf32>
    %361 = math.tanh %360 : vector<2x32xf32>
    %362 = vector.extract_strided_slice %347 {offsets = [0, 96], sizes = [2, 32], strides = [1, 1]} : vector<2x128xf32> to vector<2x32xf32>
    %363 = arith.negf %362 : vector<2x32xf32>
    %364 = math.exp %363 : vector<2x32xf32>
    %cst_96 = arith.constant 1.000000e+00 : f32
    %365 = vector.broadcast %cst_96 : f32 to vector<2x32xf32>
    %366 = arith.addf %365, %364 : vector<2x32xf32>
    %367 = arith.divf %365, %366 : vector<2x32xf32>
    %368 = arith.mulf %359, %329 : vector<2x32xf32>
    %369 = arith.mulf %353, %361 : vector<2x32xf32>
    %370 = arith.addf %368, %369 : vector<2x32xf32>
    %371 = math.tanh %370 : vector<2x32xf32>
    %372 = arith.mulf %367, %371 : vector<2x32xf32>
    %373 = vector.broadcast %342 : i32 to vector<2x1xi32>
    %374 = arith.cmpi slt, %373, %2 : vector<2x1xi32>
    %375 = vector.shape_cast %374 : vector<2x1xi1> to vector<2x1xi1>
    %376 = vector.broadcast %375 : vector<2x1xi1> to vector<2x32xi1>
    %377 = arith.select %376, %370, %329 : vector<2x32xi1>, vector<2x32xf32>
    %378 = vector.shape_cast %374 : vector<2x1xi1> to vector<2x1xi1>
    %379 = vector.broadcast %378 : vector<2x1xi1> to vector<2x32xi1>
    %380 = arith.select %379, %372, %332 : vector<2x32xi1>, vector<2x32xf32>
    %cst_97 = arith.constant 0.000000e+00 : f32
    %381 = vector.broadcast %cst_97 : f32 to vector<2x32xf32>
    %382 = vector.shape_cast %374 : vector<2x1xi1> to vector<2x1xi1>
    %383 = vector.broadcast %382 : vector<2x1xi1> to vector<2x32xi1>
    %384 = arith.select %383, %372, %381 : vector<2x32xi1>, vector<2x32xf32>
    %c0_98 = arith.constant 0 : index
    %385 = arith.index_cast %342 : i32 to index
    %c0_99 = arith.constant 0 : index
    %c0_100 = arith.constant 0 : index
    %386 = vector.load %arg4[%c0_98, %385, %c0_99, %c0_100] : memref<1x8x2x32xf32, #tpu.memory_space<vmem>>, vector<1x1x2x32xf32>
    %387 = vector.shape_cast %386 : vector<1x1x2x32xf32> to vector<2x32xf32>
    %388 = vector.shape_cast %384 : vector<2x32xf32> to vector<1x1x2x32xf32>
    tpu.vector_store %arg4[%c0_98, %385, %c0_99, %c0_100], %388 {strides = array<i32>} : memref<1x8x2x32xf32, #tpu.memory_space<vmem>>, vector<1x1x2x32xf32>,
    %c8_i32 = arith.constant 8 : i32
    return
  }
  func.func @transform_0(%arg0: i32) -> (i32, i32, i32, i32) {
    %c0_i32 = arith.constant 0 : i32
    %c0_i32_0 = arith.constant 0 : i32
    %c0_i32_1 = arith.constant 0 : i32
    %c0_i32_2 = arith.constant 0 : i32
    return %arg0, %c0_i32, %c0_i32_0, %c0_i32_1 : i32, i32, i32, i32
  }
  func.func @transform_1(%arg0: i32) -> (i32, i32) {
    %c0_i32 = arith.constant 0 : i32
    %c0_i32_0 = arith.constant 0 : i32
    %c0_i32_1 = arith.constant 0 : i32
    return %c0_i32, %c0_i32_0 : i32, i32
  }
  func.func @transform_2(%arg0: i32) -> (i32, i32, i32) {
    %c0_i32 = arith.constant 0 : i32
    %c0_i32_0 = arith.constant 0 : i32
    %c0_i32_1 = arith.constant 0 : i32
    return %arg0, %c0_i32, %c0_i32_0 : i32, i32, i32
  }
  func.func @transform_3(%arg0: i32) -> (i32, i32, i32, i32) {
    %c0_i32 = arith.constant 0 : i32
    %c0_i32_0 = arith.constant 0 : i32
    %c0_i32_1 = arith.constant 0 : i32
    %c0_i32_2 = arith.constant 0 : i32
    return %arg0, %c0_i32, %c0_i32_0, %c0_i32_1 : i32, i32, i32, i32
  }
}

module attributes {stable_mosaic.version = 11 : i64} {
  func.func @dense_bias_kernel(%arg0: i32, %arg1: memref<16x32xf32, #tpu.memory_space<vmem>>, %arg2: memref<32x256xf32, #tpu.memory_space<vmem>>, %arg3: memref<1x256xf32, #tpu.memory_space<vmem>>, %arg4: memref<16x256xf32, #tpu.memory_space<vmem>>) attributes {dimension_semantics = [#tpu.dimension_semantics<parallel>], iteration_bounds = array<i64: 1>, scalar_prefetch = 0 : i64, scratch_operands = 0 : i64, tpu.core_type = #tpu.core_type<tc>, window_params = [{transform_indices = @transform_0, window_bounds = array<i64: 16, 32>}, {pipeline_mode = #tpu.pipeline_mode<synchronous>, transform_indices = @transform_1, window_bounds = array<i64: 32, 256>}, {pipeline_mode = #tpu.pipeline_mode<synchronous>, transform_indices = @transform_2, window_bounds = array<i64: 1, 256>}, {transform_indices = @transform_3, window_bounds = array<i64: 16, 256>}]} {
    %c0 = arith.constant 0 : index
    %c0_0 = arith.constant 0 : index
    %0 = vector.load %arg1[%c0, %c0_0] : memref<16x32xf32, #tpu.memory_space<vmem>>, vector<16x32xf32>
    %c0_1 = arith.constant 0 : index
    %c0_2 = arith.constant 0 : index
    %1 = vector.load %arg2[%c0_1, %c0_2] : memref<32x256xf32, #tpu.memory_space<vmem>>, vector<32x256xf32>
    %cst = arith.constant dense<0.000000e+00> : vector<16x256xf32>
    %2 = tpu.matmul %0, %1, %cst {dimension_numbers = #tpu.dot_dimension_numbers<[1], [0], [0], [1], [0, 0, 1, 1], [], []>} : vector<16x32xf32>, vector<32x256xf32>, vector<16x256xf32> -> vector<16x256xf32>
    %c0_3 = arith.constant 0 : index
    %c0_4 = arith.constant 0 : index
    %3 = vector.load %arg3[%c0_3, %c0_4] : memref<1x256xf32, #tpu.memory_space<vmem>>, vector<1x256xf32>
    %4 = vector.broadcast %3 : vector<1x256xf32> to vector<16x256xf32>
    %5 = arith.addf %2, %4 : vector<16x256xf32>
    %c0_5 = arith.constant 0 : index
    %c0_6 = arith.constant 0 : index
    %6 = vector.load %arg4[%c0_5, %c0_6] : memref<16x256xf32, #tpu.memory_space<vmem>>, vector<16x256xf32>
    tpu.vector_store %arg4[%c0_5, %c0_6], %5 {strides = array<i32>} : memref<16x256xf32, #tpu.memory_space<vmem>>, vector<16x256xf32>,
    return
  }
  func.func @transform_0(%arg0: i32) -> (i32, i32) {
    %c0_i32 = arith.constant 0 : i32
    %c0_i32_0 = arith.constant 0 : i32
    return %arg0, %c0_i32 : i32, i32
  }
  func.func @transform_1(%arg0: i32) -> (i32, i32) {
    %c0_i32 = arith.constant 0 : i32
    %c0_i32_0 = arith.constant 0 : i32
    %c0_i32_1 = arith.constant 0 : i32
    return %c0_i32, %c0_i32_0 : i32, i32
  }
  func.func @transform_2(%arg0: i32) -> (i32, i32) {
    %c0_i32 = arith.constant 0 : i32
    %c0_i32_0 = arith.constant 0 : i32
    %c0_i32_1 = arith.constant 0 : i32
    return %c0_i32, %c0_i32_0 : i32, i32
  }
  func.func @transform_3(%arg0: i32) -> (i32, i32) {
    %c0_i32 = arith.constant 0 : i32
    %c0_i32_0 = arith.constant 0 : i32
    return %arg0, %c0_i32 : i32, i32
  }
}

module attributes {stable_mosaic.version = 11 : i64} {
  func.func @emit_crf_kernel(%arg0: i32, %arg1: memref<16x64xf32, #tpu.memory_space<vmem>>, %arg2: memref<64x8xf32, #tpu.memory_space<vmem>>, %arg3: memref<1x8xf32, #tpu.memory_space<vmem>>, %arg4: memref<1x64xf32, #tpu.memory_space<vmem>>, %arg5: memref<16x64xf32, #tpu.memory_space<vmem>>) attributes {dimension_semantics = [#tpu.dimension_semantics<parallel>], iteration_bounds = array<i64: 1>, scalar_prefetch = 0 : i64, scratch_operands = 0 : i64, tpu.core_type = #tpu.core_type<tc>, window_params = [{transform_indices = @transform_0, window_bounds = array<i64: 16, 64>}, {pipeline_mode = #tpu.pipeline_mode<synchronous>, transform_indices = @transform_1, window_bounds = array<i64: 64, 8>}, {pipeline_mode = #tpu.pipeline_mode<synchronous>, transform_indices = @transform_2, window_bounds = array<i64: 1, 8>}, {pipeline_mode = #tpu.pipeline_mode<synchronous>, transform_indices = @transform_3, window_bounds = array<i64: 1, 64>}, {transform_indices = @transform_4, window_bounds = array<i64: 16, 64>}]} {
    %c0 = arith.constant 0 : index
    %c0_0 = arith.constant 0 : index
    %0 = vector.load %arg1[%c0, %c0_0] : memref<16x64xf32, #tpu.memory_space<vmem>>, vector<16x64xf32>
    %c0_1 = arith.constant 0 : index
    %c0_2 = arith.constant 0 : index
    %1 = vector.load %arg2[%c0_1, %c0_2] : memref<64x8xf32, #tpu.memory_space<vmem>>, vector<64x8xf32>
    %cst = arith.constant dense<0.000000e+00> : vector<16x8xf32>
    %2 = tpu.matmul %0, %1, %cst {dimension_numbers = #tpu.dot_dimension_numbers<[1], [0], [0], [1], [0, 0, 1, 1], [], []>} : vector<16x64xf32>, vector<64x8xf32>, vector<16x8xf32> -> vector<16x8xf32>
    %c0_3 = arith.constant 0 : index
    %c0_4 = arith.constant 0 : index
    %3 = vector.load %arg3[%c0_3, %c0_4] : memref<1x8xf32, #tpu.memory_space<vmem>>, vector<1x8xf32>
    %4 = vector.broadcast %3 : vector<1x8xf32> to vector<16x8xf32>
    %5 = arith.addf %2, %4 : vector<16x8xf32>
    %6 = tpu.concatenate %5, %5, %5, %5, %5, %5, %5, %5 in 1 : vector<16x8xf32>, vector<16x8xf32>, vector<16x8xf32>, vector<16x8xf32>, vector<16x8xf32>, vector<16x8xf32>, vector<16x8xf32>, vector<16x8xf32> -> vector<16x64xf32>
    %c0_5 = arith.constant 0 : index
    %c0_6 = arith.constant 0 : index
    %7 = vector.load %arg4[%c0_5, %c0_6] : memref<1x64xf32, #tpu.memory_space<vmem>>, vector<1x64xf32>
    %8 = vector.broadcast %7 : vector<1x64xf32> to vector<16x64xf32>
    %9 = arith.addf %6, %8 : vector<16x64xf32>
    %c0_7 = arith.constant 0 : index
    %c0_8 = arith.constant 0 : index
    %10 = vector.load %arg5[%c0_7, %c0_8] : memref<16x64xf32, #tpu.memory_space<vmem>>, vector<16x64xf32>
    tpu.vector_store %arg5[%c0_7, %c0_8], %9 {strides = array<i32>} : memref<16x64xf32, #tpu.memory_space<vmem>>, vector<16x64xf32>,
    return
  }
  func.func @transform_0(%arg0: i32) -> (i32, i32) {
    %c0_i32 = arith.constant 0 : i32
    %c0_i32_0 = arith.constant 0 : i32
    return %arg0, %c0_i32 : i32, i32
  }
  func.func @transform_1(%arg0: i32) -> (i32, i32) {
    %c0_i32 = arith.constant 0 : i32
    %c0_i32_0 = arith.constant 0 : i32
    %c0_i32_1 = arith.constant 0 : i32
    return %c0_i32, %c0_i32_0 : i32, i32
  }
  func.func @transform_2(%arg0: i32) -> (i32, i32) {
    %c0_i32 = arith.constant 0 : i32
    %c0_i32_0 = arith.constant 0 : i32
    %c0_i32_1 = arith.constant 0 : i32
    return %c0_i32, %c0_i32_0 : i32, i32
  }
  func.func @transform_3(%arg0: i32) -> (i32, i32) {
    %c0_i32 = arith.constant 0 : i32
    %c0_i32_0 = arith.constant 0 : i32
    %c0_i32_1 = arith.constant 0 : i32
    return %c0_i32, %c0_i32_0 : i32, i32
  }
  func.func @transform_4(%arg0: i32) -> (i32, i32) {
    %c0_i32 = arith.constant 0 : i32
    %c0_i32_0 = arith.constant 0 : i32
    return %arg0, %c0_i32 : i32, i32
  }
}

</mosaic_0001>

<llo_original>
// kernel: bilstm_crf_forward.3
$region0: #{bilstm_crf_forward.3}
  #allocation0 [shape = 'u32[]', space=smem, size = 0x4, offset = 0x4, fixed_abs, tag = 'smem constant byte address 0x4 - core index']
  #allocation1 [shape = 'u32[144,128]{1,0:T(1,128)}', space=vmem, size = 0x12000, scoped, tag = 'internal scratch']
  %s0 = inlined_call_operand.vmem [shape: f32[16,32], index: 0, kind: input, shape index: {}]
  %s1 = inlined_call_operand.vmem [shape: f32[32,256], index: 1, kind: input, shape index: {}]
  %s2 = inlined_call_operand.vmem [shape: f32[1,256], index: 2, kind: input, shape index: {}]
  %s3 = inlined_call_operand.vmem [shape: f32[16,256], index: 3, kind: output, shape index: {}]
  %s4 = sld [smem:[#allocation0]]
  $region22: #{bilstm_crf_forward.3} parent=0
    _
  %s6 = ssub.s32 1, %s4
  %s7 = scalar_select 0, %s6, %s4
  // Predicated region
  $region2: #{bilstm_crf_forward.3} parent=0 // pred_check
    _
  $region3: #{bilstm_crf_forward.3} parent=0 // pred_check_branch
    %9 = sbr.rel (0) target = $region5
  $region4: #{bilstm_crf_forward.3} parent=0 // pred_region
    _
  $region5: #{bilstm_crf_forward.3} parent=0 // pred_fallthru
    _
  // Predicated region
  $region6: #{bilstm_crf_forward.3} parent=0 // pred_check
    _
  $region7: #{bilstm_crf_forward.3} parent=0 // pred_check_branch
    %11 = sbr.rel (0) target = $region9
  $region8: #{bilstm_crf_forward.3} parent=0 // pred_region
    _
  $region9: #{bilstm_crf_forward.3} parent=0 // pred_fallthru
    _
  // Predicated region
  $region10: #{bilstm_crf_forward.3} parent=0 // pred_check
    _
  $region11: #{bilstm_crf_forward.3} parent=0 // pred_check_branch
    %13 = sbr.rel (0) target = $region13
  $region12: #{bilstm_crf_forward.3} parent=0 // pred_region
    _
  $region13: #{bilstm_crf_forward.3} parent=0 // pred_fallthru
    _
  %v14 = vld [vmem:[%s0] sm:$0xff]
  %v15 = vld [vmem:[%s0 + $0x8] sm:$0xff]
  %v16 = vld [vmem:[%s1] sm:$0xff]
  %v17 = vld [vmem:[%s1 + $0x8] sm:$0xff]
  %v18 = vld [vmem:[%s1 + $0x10] sm:$0xff]
  %v19 = vld [vmem:[%s1 + $0x18] sm:$0xff]
  %v20 = vld [vmem:[%s1 + $0x20] sm:$0xff]
  %v21 = vld [vmem:[%s1 + $0x28] sm:$0xff]
  %v22 = vld [vmem:[%s1 + $0x30] sm:$0xff]
  %v23 = vld [vmem:[%s1 + $0x38] sm:$0xff]
  %v24 = vld [vmem:[%s2] sm:$0x3]
  %v26 = vlaneseq
  %v27 = vshrl.u32 %v26, 7
  %v28 = vsub.s32 0, %v27
  %v29 = vrot.slane %v24, %v28
  %v30 = vlaneseq
  %v31 = vshrl.u32 %v30, 7
  %v32 = vsub.s32 1, %v31
  %v33 = vrot.slane %v24, %v32
  %vm36 = vcmask 261120
  %v38 = vsel %vm36, %v14, 0
  %v41 = vsel %vm36, %v15, 0
  %43 = vmatprep.subr.mxu0 0.0
  %44 = vmatpush1.msra.mxu0 0.0
  %45 = vmatprep.subr.mxu0 0.0
  %46 = vmatpush1.msra.mxu0 0.0
  %47 = vmatprep.subr.mxu0 0.0
  %48 = vmatpush1.msra.mxu0 0.0
  %49 = vmatprep.subr.mxu0 0.0
  %50 = vmatpush1.msra.mxu0 0.0
  %51 = vmatprep.subr.mxu0 0.0
  %52 = vmatpush1.msra.mxu0 0.0
  %53 = vmatprep.subr.mxu0 0.0
  %54 = vmatpush1.msra.mxu0 0.0
  %55 = vmatprep.subr.mxu0 0.0
  %56 = vmatpush1.msra.mxu0 0.0
  %57 = vmatprep.subr.mxu0 0.0
  %58 = vmatpush1.msra.mxu0 0.0
  %59 = vmatprep.subr.mxu0 0.0
  %60 = vmatpush1.msra.mxu0 0.0
  %61 = vmatprep.subr.mxu0 0.0
  %62 = vmatpush1.msra.mxu0 0.0
  %63 = vmatprep.subr.mxu0 0.0
  %64 = vmatpush1.msra.mxu0 0.0
  %65 = vmatprep.subr.mxu0 0.0
  %66 = vmatpush1.msra.mxu0 0.0
  %67 = vmatprep.subr.mxu0 %v23
  %68 = vmatpush1.msra.mxu0 %v22
  %69 = vmatprep.subr.mxu0 %v21
  %70 = vmatpush1.msra.mxu0 %v20
  %71 = vmatprep.subr.mxu0 %v19
  %72 = vmatpush1.msra.mxu0 %v18
  %73 = vmatprep.subr.mxu0 %v17
  %74 = vmatpush1.msra.mxu0 %v16
  %75 = vmatprep.subr.mxu0 0.0
  %76 = vmatpush2.msra.mxu0 0.0
  %77 = vmatprep.subr.mxu0 0.0
  %78 = vmatpush2.msra.mxu0 0.0
  %79 = vmatprep.subr.mxu0 0.0
  %80 = vmatpush2.msra.mxu0 0.0
  %81 = vmatprep.subr.mxu0 0.0
  %82 = vmatpush2.msra.mxu0 0.0
  %83 = vmatprep.subr.mxu0 0.0
  %84 = vmatpush2.msra.mxu0 0.0
  %85 = vmatprep.subr.mxu0 0.0
  %86 = vmatpush2.msra.mxu0 0.0
  %87 = vmatprep.subr.mxu0 0.0
  %88 = vmatpush2.msra.mxu0 0.0
  %89 = vmatprep.subr.mxu0 0.0
  %90 = vmatpush2.msra.mxu0 0.0
  %91 = vmatprep.subr.mxu0 0.0
  %92 = vmatpush2.msra.mxu0 0.0
  %93 = vmatprep.subr.mxu0 0.0
  %94 = vmatpush2.msra.mxu0 0.0
  %95 = vmatprep.subr.mxu0 0.0
  %96 = vmatpush2.msra.mxu0 0.0
  %97 = vmatprep.subr.mxu0 0.0
  %98 = vmatpush2.msra.mxu0 0.0
  %99 = vmatprep.subr.mxu0 0.0
  %100 = vmatpush2.msra.mxu0 0.0
  %101 = vmatprep.subr.mxu0 0.0
  %102 = vmatpush2.msra.mxu0 0.0
  %103 = vmatprep.subr.mxu0 0.0
  %104 = vmatpush2.msra.mxu0 0.0
  %105 = vmatprep.subr.mxu0 0.0
  %106 = vmatpush2.msra.mxu0 0.0
  %107 = vmatprep.mubr.f32.mxu0 0.0
  %108 = vmatmul.mubr.f32.gmra.mxu0 %v38
  %v109 = vpop.f32.mrf.mxu0
  %v110 = vadd.f32 %v29, %v109
  %v111 = vpop.f32.mrf.mxu0
  %v112 = vadd.f32 %v33, %v111
  %113 = vmatprep.mubr.f32.mxu0 0.0
  %114 = vmatmul.mubr.f32.gmra.mxu0 %v41
  %v115 = vpop.f32.mrf.mxu0
  %v116 = vadd.f32 %v29, %v115
  %v117 = vpop.f32.mrf.mxu0
  %v118 = vadd.f32 %v33, %v117
  %119 = vdwg.mxu0
  %120 = vst [vmem:[%s3] sm:$0xff] %v110
  %121 = vst [vmem:[%s3 + $0x8] sm:$0xff] %v112
  %122 = vst [vmem:[%s3 + $0x10] sm:$0xff] %v116
  %123 = vst [vmem:[%s3 + $0x18] sm:$0xff] %v118
  // Predicated region
  $region14: #{bilstm_crf_forward.3} parent=0 // pred_check
    _
  $region15: #{bilstm_crf_forward.3} parent=0 // pred_check_branch
    %125 = sbr.rel (0) target = $region17
  $region16: #{bilstm_crf_forward.3} parent=0 // pred_region
    _
  $region17: #{bilstm_crf_forward.3} parent=0 // pred_fallthru
    _
  // Predicated region
  $region18: #{bilstm_crf_forward.3} parent=0 // pred_check
    _
  $region19: #{bilstm_crf_forward.3} parent=0 // pred_check_branch
    %127 = sbr.rel (0) target = $region21
  $region20: #{bilstm_crf_forward.3} parent=0 // pred_region
    _
  $region21: #{bilstm_crf_forward.3} parent=0 // pred_fallthru
    _

// kernel: bilstm_crf_forward.5
$region0: #{bilstm_crf_forward.5}
  #allocation0 [shape = 'u32[]', space=smem, size = 0x4, offset = 0x4, fixed_abs, tag = 'smem constant byte address 0x4 - core index']
  #allocation1 [shape = 'u32[144,128]{1,0:T(1,128)}', space=vmem, size = 0x12000, scoped, tag = 'internal scratch']
  %s0 = inlined_call_operand.vmem [shape: f32[16,64], index: 0, kind: input, shape index: {}]
  %s1 = inlined_call_operand.vmem [shape: f32[64,8], index: 1, kind: input, shape index: {}]
  %s2 = inlined_call_operand.vmem [shape: f32[1,8], index: 2, kind: input, shape index: {}]
  %s3 = inlined_call_operand.vmem [shape: f32[1,64], index: 3, kind: input, shape index: {}]
  %s4 = inlined_call_operand.vmem [shape: f32[16,64], index: 4, kind: output, shape index: {}]
  %s5 = sld [smem:[#allocation0]]
  $region26: #{bilstm_crf_forward.5} parent=0
    _
  %s7 = ssub.s32 1, %s5
  %s8 = scalar_select 0, %s7, %s5
  // Predicated region
  $region2: #{bilstm_crf_forward.5} parent=0 // pred_check
    _
  $region3: #{bilstm_crf_forward.5} parent=0 // pred_check_branch
    %10 = sbr.rel (0) target = $region5
  $region4: #{bilstm_crf_forward.5} parent=0 // pred_region
    _
  $region5: #{bilstm_crf_forward.5} parent=0 // pred_fallthru
    _
  // Predicated region
  $region6: #{bilstm_crf_forward.5} parent=0 // pred_check
    _
  $region7: #{bilstm_crf_forward.5} parent=0 // pred_check_branch
    %12 = sbr.rel (0) target = $region9
  $region8: #{bilstm_crf_forward.5} parent=0 // pred_region
    _
  $region9: #{bilstm_crf_forward.5} parent=0 // pred_fallthru
    _
  // Predicated region
  $region10: #{bilstm_crf_forward.5} parent=0 // pred_check
    _
  $region11: #{bilstm_crf_forward.5} parent=0 // pred_check_branch
    %14 = sbr.rel (0) target = $region13
  $region12: #{bilstm_crf_forward.5} parent=0 // pred_region
    _
  $region13: #{bilstm_crf_forward.5} parent=0 // pred_fallthru
    _
  // Predicated region
  $region14: #{bilstm_crf_forward.5} parent=0 // pred_check
    _
  $region15: #{bilstm_crf_forward.5} parent=0 // pred_check_branch
    %16 = sbr.rel (0) target = $region17
  $region16: #{bilstm_crf_forward.5} parent=0 // pred_region
    _
  $region17: #{bilstm_crf_forward.5} parent=0 // pred_fallthru
    _
  %v17 = vld [vmem:[%s0] sm:$0xff]
  %v18 = vld [vmem:[%s0 + $0x8] sm:$0xff]
  %v19 = vld [vmem:[%s1] sm:$0xff]
  %v20 = vld [vmem:[%s1 + $0x8] sm:$0xff]
  %v21 = vld [vmem:[%s1 + $0x10] sm:$0xff]
  %v22 = vld [vmem:[%s1 + $0x18] sm:$0xff]
  %v23 = vld [vmem:[%s1 + $0x20] sm:$0xff]
  %v24 = vld [vmem:[%s1 + $0x28] sm:$0xff]
  %v25 = vld [vmem:[%s1 + $0x30] sm:$0xff]
  %v26 = vld [vmem:[%s1 + $0x38] sm:$0xff]
  %v27 = vld [vmem:[%s2] sm:$0x1]
  %v29 = vlaneseq
  %v30 = vshrl.u32 %v29, 7
  %v31 = vsub.s32 0, %v30
  %v32 = vrot.slane %v27, %v31
  %vm34 = vcmask 523264
  %v36 = vsel %vm34, %v17, 0
  %v39 = vsel %vm34, %v18, 0
  %41 = vmatprep.subr.mxu0 0.0
  %42 = vmatpush1.msra.mxu0 0.0
  %43 = vmatprep.subr.mxu0 0.0
  %44 = vmatpush1.msra.mxu0 0.0
  %45 = vmatprep.subr.mxu0 0.0
  %46 = vmatpush1.msra.mxu0 0.0
  %47 = vmatprep.subr.mxu0 0.0
  %48 = vmatpush1.msra.mxu0 0.0
  %49 = vmatprep.subr.mxu0 0.0
  %50 = vmatpush1.msra.mxu0 0.0
  %51 = vmatprep.subr.mxu0 0.0
  %52 = vmatpush1.msra.mxu0 0.0
  %53 = vmatprep.subr.mxu0 0.0
  %54 = vmatpush1.msra.mxu0 0.0
  %55 = vmatprep.subr.mxu0 0.0
  %56 = vmatpush1.msra.mxu0 0.0
  %57 = vmatprep.subr.mxu0 0.0
  %58 = vmatpush1.msra.mxu0 %v26
  %59 = vmatprep.subr.mxu0 0.0
  %60 = vmatpush1.msra.mxu0 %v25
  %61 = vmatprep.subr.mxu0 0.0
  %62 = vmatpush1.msra.mxu0 %v24
  %63 = vmatprep.subr.mxu0 0.0
  %64 = vmatpush1.msra.mxu0 %v23
  %65 = vmatprep.subr.mxu0 0.0
  %66 = vmatpush1.msra.mxu0 %v22
  %67 = vmatprep.subr.mxu0 0.0
  %68 = vmatpush1.msra.mxu0 %v21
  %69 = vmatprep.subr.mxu0 0.0
  %70 = vmatpush1.msra.mxu0 %v20
  %71 = vmatprep.subr.mxu0 0.0
  %72 = vmatpush1.msra.mxu0 %v19
  %73 = vmatprep.subr.mxu0 0.0
  %74 = vmatpush2.msra.mxu0 0.0
  %75 = vmatprep.subr.mxu0 0.0
  %76 = vmatpush2.msra.mxu0 0.0
  %77 = vmatprep.subr.mxu0 0.0
  %78 = vmatpush2.msra.mxu0 0.0
  %79 = vmatprep.subr.mxu0 0.0
  %80 = vmatpush2.msra.mxu0 0.0
  %81 = vmatprep.subr.mxu0 0.0
  %82 = vmatpush2.msra.mxu0 0.0
  %83 = vmatprep.subr.mxu0 0.0
  %84 = vmatpush2.msra.mxu0 0.0
  %85 = vmatprep.subr.mxu0 0.0
  %86 = vmatpush2.msra.mxu0 0.0
  %87 = vmatprep.subr.mxu0 0.0
  %88 = vmatpush2.msra.mxu0 0.0
  %89 = vmatprep.subr.mxu0 0.0
  %90 = vmatpush2.msra.mxu0 0.0
  %91 = vmatprep.subr.mxu0 0.0
  %92 = vmatpush2.msra.mxu0 0.0
  %93 = vmatprep.subr.mxu0 0.0
  %94 = vmatpush2.msra.mxu0 0.0
  %95 = vmatprep.subr.mxu0 0.0
  %96 = vmatpush2.msra.mxu0 0.0
  %97 = vmatprep.subr.mxu0 0.0
  %98 = vmatpush2.msra.mxu0 0.0
  %99 = vmatprep.subr.mxu0 0.0
  %100 = vmatpush2.msra.mxu0 0.0
  %101 = vmatprep.subr.mxu0 0.0
  %102 = vmatpush2.msra.mxu0 0.0
  %103 = vmatprep.subr.mxu0 0.0
  %104 = vmatpush2.msra.mxu0 0.0
  %105 = vmatprep.mubr.f32.mxu0 0.0
  %106 = vmatmul.mubr.f32.gmra.mxu0 %v36
  %v107 = vpop.f32.mrf.mxu0
  %v108 = vadd.f32 %v32, %v107
  %v109 = vpop.f32.mrf.mxu0
  %110 = vmatprep.mubr.f32.mxu0 0.0
  %111 = vmatmul.mubr.f32.gmra.mxu0 %v39
  %v112 = vpop.f32.mrf.mxu0
  %v113 = vadd.f32 %v32, %v112
  %v114 = vpop.f32.mrf.mxu0
  %115 = vdwg.mxu0
  %118 = vrot.lane.b32.xlu0 %v108, 8
  %v119 = vpop.permute.xlu0 %118
  %120 = vrot.lane.b32.xlu0 %v113, 8
  %v121 = vpop.permute.xlu0 %120
  %124 = vrot.lane.b32.xlu0 %v108, 16
  %v125 = vpop.permute.xlu0 %124
  %126 = vrot.lane.b32.xlu0 %v113, 16
  %v127 = vpop.permute.xlu0 %126
  %130 = vrot.lane.b32.xlu0 %v108, 24
  %v131 = vpop.permute.xlu0 %130
  %132 = vrot.lane.b32.xlu0 %v113, 24
  %v133 = vpop.permute.xlu0 %132
  %136 = vrot.lane.b32.xlu0 %v108, 32
  %v137 = vpop.permute.xlu0 %136
  %138 = vrot.lane.b32.xlu0 %v113, 32
  %v139 = vpop.permute.xlu0 %138
  %142 = vrot.lane.b32.xlu0 %v108, 40
  %v143 = vpop.permute.xlu0 %142
  %144 = vrot.lane.b32.xlu0 %v113, 40
  %v145 = vpop.permute.xlu0 %144
  %148 = vrot.lane.b32.xlu0 %v108, 48
  %v149 = vpop.permute.xlu0 %148
  %150 = vrot.lane.b32.xlu0 %v113, 48
  %v151 = vpop.permute.xlu0 %150
  %154 = vrot.lane.b32.xlu0 %v108, 56
  %v155 = vpop.permute.xlu0 %154
  %156 = vrot.lane.b32.xlu0 %v113, 56
  %v157 = vpop.permute.xlu0 %156
  %vm160 = vcmask 64512
  %v161 = vsel %vm160, %v108, %v119
  %v162 = vsel %vm160, %v113, %v121
  %vm163 = vcmask 130048
  %v164 = vsel %vm163, %v161, %v125
  %v165 = vsel %vm163, %v162, %v127
  %vm166 = vcmask 195584
  %v167 = vsel %vm166, %v164, %v131
  %v168 = vsel %vm166, %v165, %v133
  %vm169 = vcmask 261120
  %v170 = vsel %vm169, %v167, %v137
  %v171 = vsel %vm169, %v168, %v139
  %vm172 = vcmask 326656
  %v173 = vsel %vm172, %v170, %v143
  %v174 = vsel %vm172, %v171, %v145
  %vm175 = vcmask 392192
  %v176 = vsel %vm175, %v173, %v149
  %v177 = vsel %vm175, %v174, %v151
  %vm178 = vcmask 457728
  %v179 = vsel %vm178, %v176, %v155
  %v180 = vsel %vm178, %v177, %v157
  %v181 = vld [vmem:[%s3] sm:$0x1]
  %v183 = vlaneseq
  %v184 = vshrl.u32 %v183, 7
  %v185 = vsub.s32 0, %v184
  %v186 = vrot.slane %v181, %v185
  %v188 = vadd.f32 %v179, %v186
  %v189 = vadd.f32 %v180, %v186
  %190 = vst.msk [vmem:[%s4] sm:$0xff] %vm34, %v188
  %191 = vst.msk [vmem:[%s4 + $0x8] sm:$0xff] %vm34, %v189
  // Predicated region
  $region18: #{bilstm_crf_forward.5} parent=0 // pred_check
    _
  $region19: #{bilstm_crf_forward.5} parent=0 // pred_check_branch
    %193 = sbr.rel (0) target = $region21
  $region20: #{bilstm_crf_forward.5} parent=0 // pred_region
    _
  $region21: #{bilstm_crf_forward.5} parent=0 // pred_fallthru
    _
  // Predicated region
  $region22: #{bilstm_crf_forward.5} parent=0 // pred_check
    _
  $region23: #{bilstm_crf_forward.5} parent=0 // pred_check_branch
    %195 = sbr.rel (0) target = $region25
  $region24: #{bilstm_crf_forward.5} parent=0 // pred_region
    _
  $region25: #{bilstm_crf_forward.5} parent=0 // pred_fallthru
    _

// kernel: bilstm_crf_forward.4
$region0: #{bilstm_crf_forward.4}
  #allocation0 [shape = 'u32[]', space=smem, size = 0x4, offset = 0x4, fixed_abs, tag = 'smem constant byte address 0x4 - core index']
  #allocation1 [shape = 'u32[144,128]{1,0:T(1,128)}', space=vmem, size = 0x12000, scoped, tag = 'internal scratch']
  %s0 = inlined_call_operand.vmem [shape: f32[2,8,2,128], index: 0, kind: input, shape index: {}]
  %s1 = inlined_call_operand.vmem [shape: s32[2,1], index: 1, kind: input, shape index: {}]
  %s2 = inlined_call_operand.vmem [shape: f32[2,32,128], index: 2, kind: input, shape index: {}]
  %s3 = inlined_call_operand.vmem [shape: f32[2,8,2,32], index: 3, kind: output, shape index: {}]
  %s4 = sld [smem:[#allocation0]]
  $region45: #{bilstm_crf_forward.4} parent=0
    _
  %s6 = ssub.s32 1, %s4
  %s7 = scalar_select 0, %s6, %s4
  loop: start=0, step=1, limit=4
  $region2: #{bilstm_crf_forward.4} parent=0 // loop_pre_header
    _
  $region3: #{bilstm_crf_forward.4} parent=0 // loop_header
    %s9 = sphi 0, %s13
    %p10 = scmp.ge.s32.totalorder %s9, 4
    %s19 = sphi 0, %s21
    %s22 = sphi 0, %s19
    %s23 = sphi 0, %s22
    %s39 = sphi 0, %s23
    %s43 = sphi 0, %s43
    %s45 = sphi 0, %s43
    %s46 = sphi 0, %s45
    %s60 = sphi 0, %s46
    %s66 = sphi 0, %s68
    %s69 = sphi 0, %s66
    %s70 = sphi 0, %s69
    %s86 = sphi 0, %s70
    %s92 = sphi 0, %s94
    %s95 = sphi 0, %s92
    %s96 = sphi 0, %s95
    %s112 = sphi 0, %s96
  $region4: #{bilstm_crf_forward.4} parent=0 // loop_header_branch
    %12 = sbr.rel (%p10) target = $region8
  $region5: #{bilstm_crf_forward.4} parent=0 // loop_body
    %s14 = ssub.s32 %s9, 1
    %s15 = ssub.s32 %s9, 2
    %s16 = sadd.s32 %s9, 1
    %s17 = ssub.s32 %s9, %s16
    %p18 = scmp.eq.s32.totalorder %s17, 0
    %s20 = sadd.s32 %s19, 1
    %s21 = scalar_select %p18, %s19, %s20
    %p24 = pneg %p18
    %p25 = scmp.eq.s32.totalorder %s9, 1
    %p26 = por %p24, %p25
    %p27 = scmp.ne.s32.totalorder %s19, %s22
    %p28 = scmp.eq.s32.totalorder %s9, 0
    %p29 = por %p27, %p28
    %p30 = scmp.ne.s32.totalorder %s19, %s22
    %p31 = scmp.eq.s32.totalorder %s14, 1
    %p32 = por %p30, %p31
    %p33 = scmp.ne.s32.totalorder %s22, %s23
    %p34 = scmp.eq.s32.totalorder %s14, 0
    %p35 = por %p33, %p34
    %p36 = scmp.ne.s32.totalorder %s22, %s23
    %p37 = scmp.eq.s32.totalorder %s15, 1
    %p38 = por %p36, %p37
    %p40 = scmp.ne.s32.totalorder %s23, %s39
    %p41 = scmp.eq.s32.totalorder %s15, 0
    %p42 = por %p40, %p41
    %s44 = sadd.s32 %s43, 1
    %p47 = scmp.eq.s32.totalorder %s9, 1
    %p48 = scmp.ne.s32.totalorder %s43, %s45
    %p49 = scmp.eq.s32.totalorder %s9, 0
    %p50 = por %p48, %p49
    %p51 = scmp.ne.s32.totalorder %s43, %s45
    %p52 = scmp.eq.s32.totalorder %s14, 1
    %p53 = por %p51, %p52
    %p54 = scmp.ne.s32.totalorder %s45, %s46
    %p55 = scmp.eq.s32.totalorder %s14, 0
    %p56 = por %p54, %p55
    %p57 = scmp.ne.s32.totalorder %s45, %s46
    %p58 = scmp.eq.s32.totalorder %s15, 1
    %p59 = por %p57, %p58
    %p61 = scmp.ne.s32.totalorder %s46, %s60
    %p62 = scmp.eq.s32.totalorder %s15, 0
    %p63 = por %p61, %p62
    %s64 = ssub.s32 %s9, %s16
    %p65 = scmp.eq.s32.totalorder %s64, 0
    %s67 = sadd.s32 %s66, 1
    %s68 = scalar_select %p65, %s66, %s67
    %p71 = pneg %p65
    %p72 = scmp.eq.s32.totalorder %s9, 1
    %p73 = por %p71, %p72
    %p74 = scmp.ne.s32.totalorder %s66, %s69
    %p75 = scmp.eq.s32.totalorder %s9, 0
    %p76 = por %p74, %p75
    %p77 = scmp.ne.s32.totalorder %s66, %s69
    %p78 = scmp.eq.s32.totalorder %s14, 1
    %p79 = por %p77, %p78
    %p80 = scmp.ne.s32.totalorder %s69, %s70
    %p81 = scmp.eq.s32.totalorder %s14, 0
    %p82 = por %p80, %p81
    %p83 = scmp.ne.s32.totalorder %s69, %s70
    %p84 = scmp.eq.s32.totalorder %s15, 1
    %p85 = por %p83, %p84
    %p87 = scmp.ne.s32.totalorder %s70, %s86
    %p88 = scmp.eq.s32.totalorder %s15, 0
    %p89 = por %p87, %p88
    %s90 = ssub.s32 %s9, %s16
    %p91 = scmp.eq.s32.totalorder %s90, 0
    %s93 = sadd.s32 %s92, 1
    %s94 = scalar_select %p91, %s92, %s93
    %p97 = pneg %p91
    %p98 = scmp.eq.s32.totalorder %s9, 1
    %p99 = por %p97, %p98
    %p100 = scmp.ne.s32.totalorder %s92, %s95
    %p101 = scmp.eq.s32.totalorder %s9, 0
    %p102 = por %p100, %p101
    %p103 = scmp.ne.s32.totalorder %s92, %s95
    %p104 = scmp.eq.s32.totalorder %s14, 1
    %p105 = por %p103, %p104
    %p106 = scmp.ne.s32.totalorder %s95, %s96
    %p107 = scmp.eq.s32.totalorder %s14, 0
    %p108 = por %p106, %p107
    %p109 = scmp.ne.s32.totalorder %s95, %s96
    %p110 = scmp.eq.s32.totalorder %s15, 1
    %p111 = por %p109, %p110
    %p113 = scmp.ne.s32.totalorder %s96, %s112
    %p114 = scmp.eq.s32.totalorder %s15, 0
    %p115 = por %p113, %p114
    %p116 = scmp.le.s32.totalorder 1, %s9
    %p117 = scmp.lt.s32.totalorder %s9, 3
    %p118 = pnand %p116, %p117
    %p119 = pneg %p118
    // Predicated region
    $region9: #{bilstm_crf_forward.4} parent=5 // pred_check
      _
    $region10: #{bilstm_crf_forward.4} parent=5 // pred_check_branch
      %121 = sbr.rel (%p118) target = $region12
    $region11: #{bilstm_crf_forward.4} parent=5 // pred_region
      %s122 = ssub.s32 %s9, 1
      // Predicated region
      $region13: #{bilstm_crf_forward.4} parent=11 // pred_check
        %p123 = pneg %p56
      $region14: #{bilstm_crf_forward.4} parent=11 // pred_check_branch
        %125 = sbr.rel (%p123) target = $region16
      $region15: #{bilstm_crf_forward.4} parent=11 // pred_region
        _
      $region16: #{bilstm_crf_forward.4} parent=11 // pred_fallthru
        _
    $region12: #{bilstm_crf_forward.4} parent=5 // pred_fallthru
      _
    %p126 = scmp.lt.s32.totalorder %s9, 2
    // Predicated region
    $region17: #{bilstm_crf_forward.4} parent=5 // pred_check
      %p127 = pneg %p126
    $region18: #{bilstm_crf_forward.4} parent=5 // pred_check_branch
      %129 = sbr.rel (%p127) target = $region20
    $region19: #{bilstm_crf_forward.4} parent=5 // pred_region
      // Predicated region
      $region21: #{bilstm_crf_forward.4} parent=19 // pred_check
        %p130 = pneg %p29
      $region22: #{bilstm_crf_forward.4} parent=19 // pred_check_branch
        %132 = sbr.rel (%p130) target = $region24
      $region23: #{bilstm_crf_forward.4} parent=19 // pred_region
        %p133 = scmp.lt.s32.totalorder %s9, 1
        %s134 = scalar_select %p133, %s9, 1
        %s135 = smul.addr %s134, 8
        %s136 = smul.addr %s135, 2
        %s137 = scalar_lea.vmem %s0, %s136
      $region24: #{bilstm_crf_forward.4} parent=19 // pred_fallthru
        _
      // Predicated region
      $region25: #{bilstm_crf_forward.4} parent=19 // pred_check
        %p138 = pneg %p76
      $region26: #{bilstm_crf_forward.4} parent=19 // pred_check_branch
        %140 = sbr.rel (%p138) target = $region28
      $region27: #{bilstm_crf_forward.4} parent=19 // pred_region
        %p141 = scmp.lt.s32.totalorder %s9, 1
        %s142 = scalar_select %p141, %s9, 1
        %s143 = smul.addr %s142, 4
        %s144 = smul.addr %s143, 8
        %s145 = scalar_lea.vmem %s2, %s144
      $region28: #{bilstm_crf_forward.4} parent=19 // pred_fallthru
        _
    $region20: #{bilstm_crf_forward.4} parent=5 // pred_fallthru
      _
    %p146 = scmp.le.s32.totalorder 1, %s9
    %p147 = scmp.lt.s32.totalorder %s9, 3
    %p148 = pnand %p146, %p147
    %p149 = pneg %p148
    // Predicated region
    $region29: #{bilstm_crf_forward.4} parent=5 // pred_check
      _
    $region30: #{bilstm_crf_forward.4} parent=5 // pred_check_branch
      %151 = sbr.rel (%p148) target = $region32
    $region31: #{bilstm_crf_forward.4} parent=5 // pred_region
      %s152 = ssub.s32 %s9, 1
      %p153 = scmp.lt.s32.totalorder %s14, 1
      %s154 = scalar_select %p153, %s14, 1
      %s155 = smul.addr %s154, 8
      %s156 = smul.addr %s155, 2
      %s157 = scalar_lea.vmem %s0, %s156
      %p158 = pneg %p35
      %p159 = pneg %p32
      %p160 = pneg %p56
      %p161 = pneg %p53
      %p162 = scmp.lt.s32.totalorder %s14, 1
      %s163 = scalar_select %p162, %s14, 1
      %s164 = smul.addr %s163, 4
      %s165 = smul.addr %s164, 8
      %s166 = scalar_lea.vmem %s2, %s165
      %p167 = pneg %p82
      %p168 = pneg %p79
      %p169 = pneg %p108
      %p170 = pneg %p105
      %p171 = scmp.lt.s32.totalorder %s14, 1
      %s172 = scalar_select %p171, %s14, 1
      %s173 = smul.addr %s172, 8
      %s174 = smul.addr %s173, 2
      %s175 = scalar_lea.vmem %s3, %s174
      %p176 = scmp.lt.s32.totalorder %s14, 1
      %s177 = scalar_select %p176, %s14, 1
      %s178 = smul.addr %s177, 8
      %s179 = smul.addr %s178, 2
      %s180 = scalar_lea.vmem %s0, %s179
      %p181 = scmp.lt.s32.totalorder %s14, 1
      %s182 = scalar_select %p181, %s14, 1
      %s183 = smul.addr %s182, 4
      %s184 = smul.addr %s183, 8
      %s185 = scalar_lea.vmem %s2, %s184
      %p186 = scmp.lt.s32.totalorder %s14, 1
      %s187 = scalar_select %p186, %s14, 1
      %s188 = smul.addr %s187, 8
      %s189 = smul.addr %s188, 2
      %s190 = scalar_lea.vmem %s3, %s189
      %v191 = vld [vmem:[%s185] sm:$0xff]
      %v192 = vld [vmem:[%s185 + $0x8] sm:$0xff]
      %v193 = vld [vmem:[%s185 + $0x10] sm:$0xff]
      %v194 = vld [vmem:[%s185 + $0x18] sm:$0xff]
      %v195 = vld [vmem:[%s1] sm:$0x3]
      %p196 = scmp.eq.s32.totalorder %s14, 1
      %s197 = scalar_select %p196, 7, 0
      %s198 = smul.u32 %s197, 2
      %s199 = scalar_lea.vmem %s180, %s198
      %v200 = vld [vmem:[%s199] sm:$0x3]
      %vm201 = vcmask 261120
      %v203 = vsel %vm201, 0.0, 0
      %205 = vmatprep.subr.mxu0 0.0
      %206 = vmatpush1.msra.mxu0 0.0
      %207 = vmatprep.subr.mxu0 0.0
      %208 = vmatpush1.msra.mxu0 0.0
      %209 = vmatprep.subr.mxu0 0.0
      %210 = vmatpush1.msra.mxu0 0.0
      %211 = vmatprep.subr.mxu0 0.0
      %212 = vmatpush1.msra.mxu0 0.0
      %213 = vmatprep.subr.mxu0 0.0
      %214 = vmatpush1.msra.mxu0 0.0
      %215 = vmatprep.subr.mxu0 0.0
      %216 = vmatpush1.msra.mxu0 0.0
      %217 = vmatprep.subr.mxu0 0.0
      %218 = vmatpush1.msra.mxu0 0.0
      %219 = vmatprep.subr.mxu0 0.0
      %220 = vmatpush1.msra.mxu0 0.0
      %221 = vmatprep.subr.mxu0 0.0
      %222 = vmatpush1.msra.mxu0 0.0
      %223 = vmatprep.subr.mxu0 0.0
      %224 = vmatpush1.msra.mxu0 0.0
      %225 = vmatprep.subr.mxu0 0.0
      %226 = vmatpush1.msra.mxu0 0.0
      %227 = vmatprep.subr.mxu0 0.0
      %228 = vmatpush1.msra.mxu0 0.0
      %229 = vmatprep.subr.mxu0 0.0
      %230 = vmatpush1.msra.mxu0 %v194
      %231 = vmatprep.subr.mxu0 0.0
      %232 = vmatpush1.msra.mxu0 %v193
      %233 = vmatprep.subr.mxu0 0.0
      %234 = vmatpush1.msra.mxu0 %v192
      %235 = vmatprep.subr.mxu0 0.0
      %236 = vmatpush1.msra.mxu0 %v191
      %237 = vmatprep.subr.mxu0 0.0
      %238 = vmatpush2.msra.mxu0 0.0
      %239 = vmatprep.subr.mxu0 0.0
      %240 = vmatpush2.msra.mxu0 0.0
      %241 = vmatprep.subr.mxu0 0.0
      %242 = vmatpush2.msra.mxu0 0.0
      %243 = vmatprep.subr.mxu0 0.0
      %244 = vmatpush2.msra.mxu0 0.0
      %245 = vmatprep.subr.mxu0 0.0
      %246 = vmatpush2.msra.mxu0 0.0
      %247 = vmatprep.subr.mxu0 0.0
      %248 = vmatpush2.msra.mxu0 0.0
      %249 = vmatprep.subr.mxu0 0.0
      %250 = vmatpush2.msra.mxu0 0.0
      %251 = vmatprep.subr.mxu0 0.0
      %252 = vmatpush2.msra.mxu0 0.0
      %253 = vmatprep.subr.mxu0 0.0
      %254 = vmatpush2.msra.mxu0 0.0
      %255 = vmatprep.subr.mxu0 0.0
      %256 = vmatpush2.msra.mxu0 0.0
      %257 = vmatprep.subr.mxu0 0.0
      %258 = vmatpush2.msra.mxu0 0.0
      %259 = vmatprep.subr.mxu0 0.0
      %260 = vmatpush2.msra.mxu0 0.0
      %261 = vmatprep.subr.mxu0 0.0
      %262 = vmatpush2.msra.mxu0 0.0
      %263 = vmatprep.subr.mxu0 0.0
      %264 = vmatpush2.msra.mxu0 0.0
      %265 = vmatprep.subr.mxu0 0.0
      %266 = vmatpush2.msra.mxu0 0.0
      %267 = vmatprep.subr.mxu0 0.0
      %268 = vmatpush2.msra.mxu0 0.0
      %269 = vmatprep.mubr.f32.mxu0 0.0
      %270 = vmatmul.mubr.f32.gmra.mxu0 %v203
      %v271 = vpop.f32.mrf.mxu0
      %v272 = vadd.f32 0.0, %v271
      %v273 = vpop.f32.mrf.mxu0
      %274 = vdwg.mxu0
      %v275 = vadd.f32 %v200, %v272
      %v276 = vxor.u32 %v275, 2147483648
      %v277 = vmul.f32 %v276, 1.442695
      %v278 = vpow.pop %v277
      %v279 = vadd.f32 %v278, 1.0
      %v280 = vrcp.pop %v279
      %v281 = vmul.f32 1.0, %v280
      %v282 = vtanh.pop %v275
      %v283 = vmul.f32 %v281, 0.0
      %285 = vrot.lane.b32.xlu0 %v282, 64
      %v286 = vpop.permute.xlu0 %285
      %v288 = vmul.f32 %v281, %v286
      %290 = vrot.lane.b32.xlu0 %v288, 32
      %v291 = vpop.permute.xlu0 %290
      %v293 = vadd.f32 %v283, %v291
      %v294 = vtanh.pop %v293
      %296 = vrot.lane.b32.xlu0 %v294, 64
      %v297 = vpop.permute.xlu0 %296
      %v299 = vmul.f32 %v281, %v297
      %v300 = vstv %s197
      %vm301 = vcmp.lt.s32.totalorder %v300, %v195
      %v302 = vsel %vm301, 1, 0
      %303 = vset.pattern.permute.xlu0 0
      %304 = vperm.xlu0 %303, %v302
      %v305 = vpop.permute.xlu0 %304
      %vm306 = vcmp.eq.s32.totalorder %v305, 1
      %v307 = vsel %vm306, %v293, 0.0
      %v308 = vsel %vm306, %v299, 0.0
      %310 = vrot.lane.b32.xlu0 %v308, 32
      %v311 = vpop.permute.xlu0 %310
      %s313 = scalar_lea.vmem %s190, %s198
      %vm314 = vcmask 254976
      %315 = vst.msk [vmem:[%s313] sm:$0x3] %vm314, %v311
      %s316 = scalar_select %p196, 6, 1
      %s317 = smul.u32 %s316, 2
      %s318 = scalar_lea.vmem %s180, %s317
      %v319 = vld [vmem:[%s318] sm:$0x3]
      %v320 = vsel %vm201, %v311, 0
      %322 = vmatprep.subr.mxu0 0.0
      %323 = vmatpush1.msra.mxu0 0.0
      %324 = vmatprep.subr.mxu0 0.0
      %325 = vmatpush1.msra.mxu0 0.0
      %326 = vmatprep.subr.mxu0 0.0
      %327 = vmatpush1.msra.mxu0 0.0
      %328 = vmatprep.subr.mxu0 0.0
      %329 = vmatpush1.msra.mxu0 0.0
      %330 = vmatprep.subr.mxu0 0.0
      %331 = vmatpush1.msra.mxu0 0.0
      %332 = vmatprep.subr.mxu0 0.0
      %333 = vmatpush1.msra.mxu0 0.0
      %334 = vmatprep.subr.mxu0 0.0
      %335 = vmatpush1.msra.mxu0 0.0
      %336 = vmatprep.subr.mxu0 0.0
      %337 = vmatpush1.msra.mxu0 0.0
      %338 = vmatprep.subr.mxu0 0.0
      %339 = vmatpush1.msra.mxu0 0.0
      %340 = vmatprep.subr.mxu0 0.0
      %341 = vmatpush1.msra.mxu0 0.0
      %342 = vmatprep.subr.mxu0 0.0
      %343 = vmatpush1.msra.mxu0 0.0
      %344 = vmatprep.subr.mxu0 0.0
      %345 = vmatpush1.msra.mxu0 0.0
      %346 = vmatprep.subr.mxu0 0.0
      %347 = vmatpush1.msra.mxu0 %v194
      %348 = vmatprep.subr.mxu0 0.0
      %349 = vmatpush1.msra.mxu0 %v193
      %350 = vmatprep.subr.mxu0 0.0
      %351 = vmatpush1.msra.mxu0 %v192
      %352 = vmatprep.subr.mxu0 0.0
      %353 = vmatpush1.msra.mxu0 %v191
      %354 = vmatprep.subr.mxu0 0.0
      %355 = vmatpush2.msra.mxu0 0.0
      %356 = vmatprep.subr.mxu0 0.0
      %357 = vmatpush2.msra.mxu0 0.0
      %358 = vmatprep.subr.mxu0 0.0
      %359 = vmatpush2.msra.mxu0 0.0
      %360 = vmatprep.subr.mxu0 0.0
      %361 = vmatpush2.msra.mxu0 0.0
      %362 = vmatprep.subr.mxu0 0.0
      %363 = vmatpush2.msra.mxu0 0.0
      %364 = vmatprep.subr.mxu0 0.0
      %365 = vmatpush2.msra.mxu0 0.0
      %366 = vmatprep.subr.mxu0 0.0
      %367 = vmatpush2.msra.mxu0 0.0
      %368 = vmatprep.subr.mxu0 0.0
      %369 = vmatpush2.msra.mxu0 0.0
      %370 = vmatprep.subr.mxu0 0.0
      %371 = vmatpush2.msra.mxu0 0.0
      %372 = vmatprep.subr.mxu0 0.0
      %373 = vmatpush2.msra.mxu0 0.0
      %374 = vmatprep.subr.mxu0 0.0
      %375 = vmatpush2.msra.mxu0 0.0
      %376 = vmatprep.subr.mxu0 0.0
      %377 = vmatpush2.msra.mxu0 0.0
      %378 = vmatprep.subr.mxu0 0.0
      %379 = vmatpush2.msra.mxu0 0.0
      %380 = vmatprep.subr.mxu0 0.0
      %381 = vmatpush2.msra.mxu0 0.0
      %382 = vmatprep.subr.mxu0 0.0
      %383 = vmatpush2.msra.mxu0 0.0
      %384 = vmatprep.subr.mxu0 0.0
      %385 = vmatpush2.msra.mxu0 0.0
      %386 = vmatprep.mubr.f32.mxu0 0.0
      %387 = vmatmul.mubr.f32.gmra.mxu0 %v320
      %v388 = vpop.f32.mrf.mxu0
      %v389 = vadd.f32 0.0, %v388
      %v390 = vpop.f32.mrf.mxu0
      %391 = vdwg.mxu0
      %v392 = vadd.f32 %v319, %v389
      %v393 = vxor.u32 %v392, 2147483648
      %v394 = vmul.f32 %v393, 1.442695
      %v395 = vpow.pop %v394
      %v396 = vadd.f32 %v395, 1.0
      %v397 = vrcp.pop %v396
      %v398 = vmul.f32 1.0, %v397
      %v399 = vtanh.pop %v392
      %v400 = vmul.f32 %v398, %v307
      %402 = vrot.lane.b32.xlu0 %v399, 64
      %v403 = vpop.permute.xlu0 %402
      %v405 = vmul.f32 %v398, %v403
      %407 = vrot.lane.b32.xlu0 %v405, 32
      %v408 = vpop.permute.xlu0 %407
      %v410 = vadd.f32 %v400, %v408
      %v411 = vtanh.pop %v410
      %413 = vrot.lane.b32.xlu0 %v411, 64
      %v414 = vpop.permute.xlu0 %413
      %v416 = vmul.f32 %v398, %v414
      %v417 = vstv %s316
      %vm418 = vcmp.lt.s32.totalorder %v417, %v195
      %v419 = vsel %vm418, 1, 0
      %420 = vset.pattern.permute.xlu0 0
      %421 = vperm.xlu0 %420, %v419
      %v422 = vpop.permute.xlu0 %421
      %vm423 = vcmp.eq.s32.totalorder %v422, 1
      %v424 = vsel %vm423, %v410, %v307
      %v425 = vsel %vm423, %v416, %v308
      %v426 = vsel %vm423, %v416, 0.0
      %428 = vrot.lane.b32.xlu0 %v426, 32
      %v429 = vpop.permute.xlu0 %428
      %s431 = scalar_lea.vmem %s190, %s317
      %432 = vst.msk [vmem:[%s431] sm:$0x3] %vm314, %v429
      %s433 = scalar_select %p196, 5, 2
      %s434 = smul.u32 %s433, 2
      %s435 = scalar_lea.vmem %s180, %s434
      %v436 = vld [vmem:[%s435] sm:$0x3]
      %438 = vrot.lane.b32.xlu0 %v425, 32
      %v439 = vpop.permute.xlu0 %438
      %v440 = vsel %vm201, %v439, 0
      %442 = vmatprep.subr.mxu0 0.0
      %443 = vmatpush1.msra.mxu0 0.0
      %444 = vmatprep.subr.mxu0 0.0
      %445 = vmatpush1.msra.mxu0 0.0
      %446 = vmatprep.subr.mxu0 0.0
      %447 = vmatpush1.msra.mxu0 0.0
      %448 = vmatprep.subr.mxu0 0.0
      %449 = vmatpush1.msra.mxu0 0.0
      %450 = vmatprep.subr.mxu0 0.0
      %451 = vmatpush1.msra.mxu0 0.0
      %452 = vmatprep.subr.mxu0 0.0
      %453 = vmatpush1.msra.mxu0 0.0
      %454 = vmatprep.subr.mxu0 0.0
      %455 = vmatpush1.msra.mxu0 0.0
      %456 = vmatprep.subr.mxu0 0.0
      %457 = vmatpush1.msra.mxu0 0.0
      %458 = vmatprep.subr.mxu0 0.0
      %459 = vmatpush1.msra.mxu0 0.0
      %460 = vmatprep.subr.mxu0 0.0
      %461 = vmatpush1.msra.mxu0 0.0
      %462 = vmatprep.subr.mxu0 0.0
      %463 = vmatpush1.msra.mxu0 0.0
      %464 = vmatprep.subr.mxu0 0.0
      %465 = vmatpush1.msra.mxu0 0.0
      %466 = vmatprep.subr.mxu0 0.0
      %467 = vmatpush1.msra.mxu0 %v194
      %468 = vmatprep.subr.mxu0 0.0
      %469 = vmatpush1.msra.mxu0 %v193
      %470 = vmatprep.subr.mxu0 0.0
      %471 = vmatpush1.msra.mxu0 %v192
      %472 = vmatprep.subr.mxu0 0.0
      %473 = vmatpush1.msra.mxu0 %v191
      %474 = vmatprep.subr.mxu0 0.0
      %475 = vmatpush2.msra.mxu0 0.0
      %476 = vmatprep.subr.mxu0 0.0
      %477 = vmatpush2.msra.mxu0 0.0
      %478 = vmatprep.subr.mxu0 0.0
      %479 = vmatpush2.msra.mxu0 0.0
      %480 = vmatprep.subr.mxu0 0.0
      %481 = vmatpush2.msra.mxu0 0.0
      %482 = vmatprep.subr.mxu0 0.0
      %483 = vmatpush2.msra.mxu0 0.0
      %484 = vmatprep.subr.mxu0 0.0
      %485 = vmatpush2.msra.mxu0 0.0
      %486 = vmatprep.subr.mxu0 0.0
      %487 = vmatpush2.msra.mxu0 0.0
      %488 = vmatprep.subr.mxu0 0.0
      %489 = vmatpush2.msra.mxu0 0.0
      %490 = vmatprep.subr.mxu0 0.0
      %491 = vmatpush2.msra.mxu0 0.0
      %492 = vmatprep.subr.mxu0 0.0
      %493 = vmatpush2.msra.mxu0 0.0
      %494 = vmatprep.subr.mxu0 0.0
      %495 = vmatpush2.msra.mxu0 0.0
      %496 = vmatprep.subr.mxu0 0.0
      %497 = vmatpush2.msra.mxu0 0.0
      %498 = vmatprep.subr.mxu0 0.0
      %499 = vmatpush2.msra.mxu0 0.0
      %500 = vmatprep.subr.mxu0 0.0
      %501 = vmatpush2.msra.mxu0 0.0
      %502 = vmatprep.subr.mxu0 0.0
      %503 = vmatpush2.msra.mxu0 0.0
      %504 = vmatprep.subr.mxu0 0.0
      %505 = vmatpush2.msra.mxu0 0.0
      %506 = vmatprep.mubr.f32.mxu0 0.0
      %507 = vmatmul.mubr.f32.gmra.mxu0 %v440
      %v508 = vpop.f32.mrf.mxu0
      %v509 = vadd.f32 0.0, %v508
      %v510 = vpop.f32.mrf.mxu0
      %511 = vdwg.mxu0
      %v512 = vadd.f32 %v436, %v509
      %v513 = vxor.u32 %v512, 2147483648
      %v514 = vmul.f32 %v513, 1.442695
      %v515 = vpow.pop %v514
      %v516 = vadd.f32 %v515, 1.0
      %v517 = vrcp.pop %v516
      %v518 = vmul.f32 1.0, %v517
      %v519 = vtanh.pop %v512
      %v520 = vmul.f32 %v518, %v424
      %522 = vrot.lane.b32.xlu0 %v519, 64
      %v523 = vpop.permute.xlu0 %522
      %v525 = vmul.f32 %v518, %v523
      %527 = vrot.lane.b32.xlu0 %v525, 32
      %v528 = vpop.permute.xlu0 %527
      %v530 = vadd.f32 %v520, %v528
      %v531 = vtanh.pop %v530
      %533 = vrot.lane.b32.xlu0 %v531, 64
      %v534 = vpop.permute.xlu0 %533
      %v536 = vmul.f32 %v518, %v534
      %v537 = vstv %s433
      %vm538 = vcmp.lt.s32.totalorder %v537, %v195
      %v539 = vsel %vm538, 1, 0
      %540 = vset.pattern.permute.xlu0 0
      %541 = vperm.xlu0 %540, %v539
      %v542 = vpop.permute.xlu0 %541
      %vm543 = vcmp.eq.s32.totalorder %v542, 1
      %v544 = vsel %vm543, %v530, %v424
      %v545 = vsel %vm543, %v536, %v425
      %v546 = vsel %vm543, %v536, 0.0
      %548 = vrot.lane.b32.xlu0 %v546, 32
      %v549 = vpop.permute.xlu0 %548
      %s551 = scalar_lea.vmem %s190, %s434
      %552 = vst.msk [vmem:[%s551] sm:$0x3] %vm314, %v549
      %s553 = scalar_select %p196, 4, 3
      %s554 = smul.u32 %s553, 2
      %s555 = scalar_lea.vmem %s180, %s554
      %v556 = vld [vmem:[%s555] sm:$0x3]
      %558 = vrot.lane.b32.xlu0 %v545, 32
      %v559 = vpop.permute.xlu0 %558
      %v560 = vsel %vm201, %v559, 0
      %562 = vmatprep.subr.mxu0 0.0
      %563 = vmatpush1.msra.mxu0 0.0
      %564 = vmatprep.subr.mxu0 0.0
      %565 = vmatpush1.msra.mxu0 0.0
      %566 = vmatprep.subr.mxu0 0.0
      %567 = vmatpush1.msra.mxu0 0.0
      %568 = vmatprep.subr.mxu0 0.0
      %569 = vmatpush1.msra.mxu0 0.0
      %570 = vmatprep.subr.mxu0 0.0
      %571 = vmatpush1.msra.mxu0 0.0
      %572 = vmatprep.subr.mxu0 0.0
      %573 = vmatpush1.msra.mxu0 0.0
      %574 = vmatprep.subr.mxu0 0.0
      %575 = vmatpush1.msra.mxu0 0.0
      %576 = vmatprep.subr.mxu0 0.0
      %577 = vmatpush1.msra.mxu0 0.0
      %578 = vmatprep.subr.mxu0 0.0
      %579 = vmatpush1.msra.mxu0 0.0
      %580 = vmatprep.subr.mxu0 0.0
      %581 = vmatpush1.msra.mxu0 0.0
      %582 = vmatprep.subr.mxu0 0.0
      %583 = vmatpush1.msra.mxu0 0.0
      %584 = vmatprep.subr.mxu0 0.0
      %585 = vmatpush1.msra.mxu0 0.0
      %586 = vmatprep.subr.mxu0 0.0
      %587 = vmatpush1.msra.mxu0 %v194
      %588 = vmatprep.subr.mxu0 0.0
      %589 = vmatpush1.msra.mxu0 %v193
      %590 = vmatprep.subr.mxu0 0.0
      %591 = vmatpush1.msra.mxu0 %v192
      %592 = vmatprep.subr.mxu0 0.0
      %593 = vmatpush1.msra.mxu0 %v191
      %594 = vmatprep.subr.mxu0 0.0
      %595 = vmatpush2.msra.mxu0 0.0
      %596 = vmatprep.subr.mxu0 0.0
      %597 = vmatpush2.msra.mxu0 0.0
      %598 = vmatprep.subr.mxu0 0.0
      %599 = vmatpush2.msra.mxu0 0.0
      %600 = vmatprep.subr.mxu0 0.0
      %601 = vmatpush2.msra.mxu0 0.0
      %602 = vmatprep.subr.mxu0 0.0
      %603 = vmatpush2.msra.mxu0 0.0
      %604 = vmatprep.subr.mxu0 0.0
      %605 = vmatpush2.msra.mxu0 0.0
      %606 = vmatprep.subr.mxu0 0.0
      %607 = vmatpush2.msra.mxu0 0.0
      %608 = vmatprep.subr.mxu0 0.0
      %609 = vmatpush2.msra.mxu0 0.0
      %610 = vmatprep.subr.mxu0 0.0
      %611 = vmatpush2.msra.mxu0 0.0
      %612 = vmatprep.subr.mxu0 0.0
      %613 = vmatpush2.msra.mxu0 0.0
      %614 = vmatprep.subr.mxu0 0.0
      %615 = vmatpush2.msra.mxu0 0.0
      %616 = vmatprep.subr.mxu0 0.0
      %617 = vmatpush2.msra.mxu0 0.0
      %618 = vmatprep.subr.mxu0 0.0
      %619 = vmatpush2.msra.mxu0 0.0
      %620 = vmatprep.subr.mxu0 0.0
      %621 = vmatpush2.msra.mxu0 0.0
      %622 = vmatprep.subr.mxu0 0.0
      %623 = vmatpush2.msra.mxu0 0.0
      %624 = vmatprep.subr.mxu0 0.0
      %625 = vmatpush2.msra.mxu0 0.0
      %626 = vmatprep.mubr.f32.mxu0 0.0
      %627 = vmatmul.mubr.f32.gmra.mxu0 %v560
      %v628 = vpop.f32.mrf.mxu0
      %v629 = vadd.f32 0.0, %v628
      %v630 = vpop.f32.mrf.mxu0
      %631 = vdwg.mxu0
      %v632 = vadd.f32 %v556, %v629
      %v633 = vxor.u32 %v632, 2147483648
      %v634 = vmul.f32 %v633, 1.442695
      %v635 = vpow.pop %v634
      %v636 = vadd.f32 %v635, 1.0
      %v637 = vrcp.pop %v636
      %v638 = vmul.f32 1.0, %v637
      %v639 = vtanh.pop %v632
      %v640 = vmul.f32 %v638, %v544
      %642 = vrot.lane.b32.xlu0 %v639, 64
      %v643 = vpop.permute.xlu0 %642
      %v645 = vmul.f32 %v638, %v643
      %647 = vrot.lane.b32.xlu0 %v645, 32
      %v648 = vpop.permute.xlu0 %647
      %v650 = vadd.f32 %v640, %v648
      %v651 = vtanh.pop %v650
      %653 = vrot.lane.b32.xlu0 %v651, 64
      %v654 = vpop.permute.xlu0 %653
      %v656 = vmul.f32 %v638, %v654
      %v657 = vstv %s553
      %vm658 = vcmp.lt.s32.totalorder %v657, %v195
      %v659 = vsel %vm658, 1, 0
      %660 = vset.pattern.permute.xlu0 0
      %661 = vperm.xlu0 %660, %v659
      %v662 = vpop.permute.xlu0 %661
      %vm663 = vcmp.eq.s32.totalorder %v662, 1
      %v664 = vsel %vm663, %v650, %v544
      %v665 = vsel %vm663, %v656, %v545
      %v666 = vsel %vm663, %v656, 0.0
      %668 = vrot.lane.b32.xlu0 %v666, 32
      %v669 = vpop.permute.xlu0 %668
      %s671 = scalar_lea.vmem %s190, %s554
      %672 = vst.msk [vmem:[%s671] sm:$0x3] %vm314, %v669
      %s673 = scalar_select %p196, 3, 4
      %s674 = smul.u32 %s673, 2
      %s675 = scalar_lea.vmem %s180, %s674
      %v676 = vld [vmem:[%s675] sm:$0x3]
      %678 = vrot.lane.b32.xlu0 %v665, 32
      %v679 = vpop.permute.xlu0 %678
      %v680 = vsel %vm201, %v679, 0
      %682 = vmatprep.subr.mxu0 0.0
      %683 = vmatpush1.msra.mxu0 0.0
      %684 = vmatprep.subr.mxu0 0.0
      %685 = vmatpush1.msra.mxu0 0.0
      %686 = vmatprep.subr.mxu0 0.0
      %687 = vmatpush1.msra.mxu0 0.0
      %688 = vmatprep.subr.mxu0 0.0
      %689 = vmatpush1.msra.mxu0 0.0
      %690 = vmatprep.subr.mxu0 0.0
      %691 = vmatpush1.msra.mxu0 0.0
      %692 = vmatprep.subr.mxu0 0.0
      %693 = vmatpush1.msra.mxu0 0.0
      %694 = vmatprep.subr.mxu0 0.0
      %695 = vmatpush1.msra.mxu0 0.0
      %696 = vmatprep.subr.mxu0 0.0
      %697 = vmatpush1.msra.mxu0 0.0
      %698 = vmatprep.subr.mxu0 0.0
      %699 = vmatpush1.msra.mxu0 0.0
      %700 = vmatprep.subr.mxu0 0.0
      %701 = vmatpush1.msra.mxu0 0.0
      %702 = vmatprep.subr.mxu0 0.0
      %703 = vmatpush1.msra.mxu0 0.0
      %704 = vmatprep.subr.mxu0 0.0
      %705 = vmatpush1.msra.mxu0 0.0
      %706 = vmatprep.subr.mxu0 0.0
      %707 = vmatpush1.msra.mxu0 %v194
      %708 = vmatprep.subr.mxu0 0.0
      %709 = vmatpush1.msra.mxu0 %v193
      %710 = vmatprep.subr.mxu0 0.0
      %711 = vmatpush1.msra.mxu0 %v192
      %712 = vmatprep.subr.mxu0 0.0
      %713 = vmatpush1.msra.mxu0 %v191
      %714 = vmatprep.subr.mxu0 0.0
      %715 = vmatpush2.msra.mxu0 0.0
      %716 = vmatprep.subr.mxu0 0.0
      %717 = vmatpush2.msra.mxu0 0.0
      %718 = vmatprep.subr.mxu0 0.0
      %719 = vmatpush2.msra.mxu0 0.0
      %720 = vmatprep.subr.mxu0 0.0
      %721 = vmatpush2.msra.mxu0 0.0
      %722 = vmatprep.subr.mxu0 0.0
      %723 = vmatpush2.msra.mxu0 0.0
      %724 = vmatprep.subr.mxu0 0.0
      %725 = vmatpush2.msra.mxu0 0.0
      %726 = vmatprep.subr.mxu0 0.0
      %727 = vmatpush2.msra.mxu0 0.0
      %728 = vmatprep.subr.mxu0 0.0
      %729 = vmatpush2.msra.mxu0 0.0
      %730 = vmatprep.subr.mxu0 0.0
      %731 = vmatpush2.msra.mxu0 0.0
      %732 = vmatprep.subr.mxu0 0.0
      %733 = vmatpush2.msra.mxu0 0.0
      %734 = vmatprep.subr.mxu0 0.0
      %735 = vmatpush2.msra.mxu0 0.0
      %736 = vmatprep.subr.mxu0 0.0
      %737 = vmatpush2.msra.mxu0 0.0
      %738 = vmatprep.subr.mxu0 0.0
      %739 = vmatpush2.msra.mxu0 0.0
      %740 = vmatprep.subr.mxu0 0.0
      %741 = vmatpush2.msra.mxu0 0.0
      %742 = vmatprep.subr.mxu0 0.0
      %743 = vmatpush2.msra.mxu0 0.0
      %744 = vmatprep.subr.mxu0 0.0
      %745 = vmatpush2.msra.mxu0 0.0
      %746 = vmatprep.mubr.f32.mxu0 0.0
      %747 = vmatmul.mubr.f32.gmra.mxu0 %v680
      %v748 = vpop.f32.mrf.mxu0
      %v749 = vadd.f32 0.0, %v748
      %v750 = vpop.f32.mrf.mxu0
      %751 = vdwg.mxu0
      %v752 = vadd.f32 %v676, %v749
      %v753 = vxor.u32 %v752, 2147483648
      %v754 = vmul.f32 %v753, 1.442695
      %v755 = vpow.pop %v754
      %v756 = vadd.f32 %v755, 1.0
      %v757 = vrcp.pop %v756
      %v758 = vmul.f32 1.0, %v757
      %v759 = vtanh.pop %v752
      %v760 = vmul.f32 %v758, %v664
      %762 = vrot.lane.b32.xlu0 %v759, 64
      %v763 = vpop.permute.xlu0 %762
      %v765 = vmul.f32 %v758, %v763
      %767 = vrot.lane.b32.xlu0 %v765, 32
      %v768 = vpop.permute.xlu0 %767
      %v770 = vadd.f32 %v760, %v768
      %v771 = vtanh.pop %v770
      %773 = vrot.lane.b32.xlu0 %v771, 64
      %v774 = vpop.permute.xlu0 %773
      %v776 = vmul.f32 %v758, %v774
      %v777 = vstv %s673
      %vm778 = vcmp.lt.s32.totalorder %v777, %v195
      %v779 = vsel %vm778, 1, 0
      %780 = vset.pattern.permute.xlu0 0
      %781 = vperm.xlu0 %780, %v779
      %v782 = vpop.permute.xlu0 %781
      %vm783 = vcmp.eq.s32.totalorder %v782, 1
      %v784 = vsel %vm783, %v770, %v664
      %v785 = vsel %vm783, %v776, %v665
      %v786 = vsel %vm783, %v776, 0.0
      %788 = vrot.lane.b32.xlu0 %v786, 32
      %v789 = vpop.permute.xlu0 %788
      %s791 = scalar_lea.vmem %s190, %s674
      %792 = vst.msk [vmem:[%s791] sm:$0x3] %vm314, %v789
      %s793 = scalar_select %p196, 2, 5
      %s794 = smul.u32 %s793, 2
      %s795 = scalar_lea.vmem %s180, %s794
      %v796 = vld [vmem:[%s795] sm:$0x3]
      %798 = vrot.lane.b32.xlu0 %v785, 32
      %v799 = vpop.permute.xlu0 %798
      %v800 = vsel %vm201, %v799, 0
      %802 = vmatprep.subr.mxu0 0.0
      %803 = vmatpush1.msra.mxu0 0.0
      %804 = vmatprep.subr.mxu0 0.0
      %805 = vmatpush1.msra.mxu0 0.0
      %806 = vmatprep.subr.mxu0 0.0
      %807 = vmatpush1.msra.mxu0 0.0
      %808 = vmatprep.subr.mxu0 0.0
      %809 = vmatpush1.msra.mxu0 0.0
      %810 = vmatprep.subr.mxu0 0.0
      %811 = vmatpush1.msra.mxu0 0.0
      %812 = vmatprep.subr.mxu0 0.0
      %813 = vmatpush1.msra.mxu0 0.0
      %814 = vmatprep.subr.mxu0 0.0
      %815 = vmatpush1.msra.mxu0 0.0
      %816 = vmatprep.subr.mxu0 0.0
      %817 = vmatpush1.msra.mxu0 0.0
      %818 = vmatprep.subr.mxu0 0.0
      %819 = vmatpush1.msra.mxu0 0.0
      %820 = vmatprep.subr.mxu0 0.0
      %821 = vmatpush1.msra.mxu0 0.0
      %822 = vmatprep.subr.mxu0 0.0
      %823 = vmatpush1.msra.mxu0 0.0
      %824 = vmatprep.subr.mxu0 0.0
      %825 = vmatpush1.msra.mxu0 0.0
      %826 = vmatprep.subr.mxu0 0.0
      %827 = vmatpush1.msra.mxu0 %v194
      %828 = vmatprep.subr.mxu0 0.0
      %829 = vmatpush1.msra.mxu0 %v193
      %830 = vmatprep.subr.mxu0 0.0
      %831 = vmatpush1.msra.mxu0 %v192
      %832 = vmatprep.subr.mxu0 0.0
      %833 = vmatpush1.msra.mxu0 %v191
      %834 = vmatprep.subr.mxu0 0.0
      %835 = vmatpush2.msra.mxu0 0.0
      %836 = vmatprep.subr.mxu0 0.0
      %837 = vmatpush2.msra.mxu0 0.0
      %838 = vmatprep.subr.mxu0 0.0
      %839 = vmatpush2.msra.mxu0 0.0
      %840 = vmatprep.subr.mxu0 0.0
      %841 = vmatpush2.msra.mxu0 0.0
      %842 = vmatprep.subr.mxu0 0.0
      %843 = vmatpush2.msra.mxu0 0.0
      %844 = vmatprep.subr.mxu0 0.0
      %845 = vmatpush2.msra.mxu0 0.0
      %846 = vmatprep.subr.mxu0 0.0
      %847 = vmatpush2.msra.mxu0 0.0
      %848 = vmatprep.subr.mxu0 0.0
      %849 = vmatpush2.msra.mxu0 0.0
      %850 = vmatprep.subr.mxu0 0.0
      %851 = vmatpush2.msra.mxu0 0.0
      %852 = vmatprep.subr.mxu0 0.0
      %853 = vmatpush2.msra.mxu0 0.0
      %854 = vmatprep.subr.mxu0 0.0
      %855 = vmatpush2.msra.mxu0 0.0
      %856 = vmatprep.subr.mxu0 0.0
      %857 = vmatpush2.msra.mxu0 0.0
      %858 = vmatprep.subr.mxu0 0.0
      %859 = vmatpush2.msra.mxu0 0.0
      %860 = vmatprep.subr.mxu0 0.0
      %861 = vmatpush2.msra.mxu0 0.0
      %862 = vmatprep.subr.mxu0 0.0
      %863 = vmatpush2.msra.mxu0 0.0
      %864 = vmatprep.subr.mxu0 0.0
      %865 = vmatpush2.msra.mxu0 0.0
      %866 = vmatprep.mubr.f32.mxu0 0.0
      %867 = vmatmul.mubr.f32.gmra.mxu0 %v800
      %v868 = vpop.f32.mrf.mxu0
      %v869 = vadd.f32 0.0, %v868
      %v870 = vpop.f32.mrf.mxu0
      %871 = vdwg.mxu0
      %v872 = vadd.f32 %v796, %v869
      %v873 = vxor.u32 %v872, 2147483648
      %v874 = vmul.f32 %v873, 1.442695
      %v875 = vpow.pop %v874
      %v876 = vadd.f32 %v875, 1.0
      %v877 = vrcp.pop %v876
      %v878 = vmul.f32 1.0, %v877
      %v879 = vtanh.pop %v872
      %v880 = vmul.f32 %v878, %v784
      %882 = vrot.lane.b32.xlu0 %v879, 64
      %v883 = vpop.permute.xlu0 %882
      %v885 = vmul.f32 %v878, %v883
      %887 = vrot.lane.b32.xlu0 %v885, 32
      %v888 = vpop.permute.xlu0 %887
      %v890 = vadd.f32 %v880, %v888
      %v891 = vtanh.pop %v890
      %893 = vrot.lane.b32.xlu0 %v891, 64
      %v894 = vpop.permute.xlu0 %893
      %v896 = vmul.f32 %v878, %v894
      %v897 = vstv %s793
      %vm898 = vcmp.lt.s32.totalorder %v897, %v195
      %v899 = vsel %vm898, 1, 0
      %900 = vset.pattern.permute.xlu0 0
      %901 = vperm.xlu0 %900, %v899
      %v902 = vpop.permute.xlu0 %901
      %vm903 = vcmp.eq.s32.totalorder %v902, 1
      %v904 = vsel %vm903, %v890, %v784
      %v905 = vsel %vm903, %v896, %v785
      %v906 = vsel %vm903, %v896, 0.0
      %908 = vrot.lane.b32.xlu0 %v906, 32
      %v909 = vpop.permute.xlu0 %908
      %s911 = scalar_lea.vmem %s190, %s794
      %912 = vst.msk [vmem:[%s911] sm:$0x3] %vm314, %v909
      %s913 = scalar_select %p196, 1, 6
      %s914 = smul.u32 %s913, 2
      %s915 = scalar_lea.vmem %s180, %s914
      %v916 = vld [vmem:[%s915] sm:$0x3]
      %918 = vrot.lane.b32.xlu0 %v905, 32
      %v919 = vpop.permute.xlu0 %918
      %v920 = vsel %vm201, %v919, 0
      %922 = vmatprep.subr.mxu0 0.0
      %923 = vmatpush1.msra.mxu0 0.0
      %924 = vmatprep.subr.mxu0 0.0
      %925 = vmatpush1.msra.mxu0 0.0
      %926 = vmatprep.subr.mxu0 0.0
      %927 = vmatpush1.msra.mxu0 0.0
      %928 = vmatprep.subr.mxu0 0.0
      %929 = vmatpush1.msra.mxu0 0.0
      %930 = vmatprep.subr.mxu0 0.0
      %931 = vmatpush1.msra.mxu0 0.0
      %932 = vmatprep.subr.mxu0 0.0
      %933 = vmatpush1.msra.mxu0 0.0
      %934 = vmatprep.subr.mxu0 0.0
      %935 = vmatpush1.msra.mxu0 0.0
      %936 = vmatprep.subr.mxu0 0.0
      %937 = vmatpush1.msra.mxu0 0.0
      %938 = vmatprep.subr.mxu0 0.0
      %939 = vmatpush1.msra.mxu0 0.0
      %940 = vmatprep.subr.mxu0 0.0
      %941 = vmatpush1.msra.mxu0 0.0
      %942 = vmatprep.subr.mxu0 0.0
      %943 = vmatpush1.msra.mxu0 0.0
      %944 = vmatprep.subr.mxu0 0.0
      %945 = vmatpush1.msra.mxu0 0.0
      %946 = vmatprep.subr.mxu0 0.0
      %947 = vmatpush1.msra.mxu0 %v194
      %948 = vmatprep.subr.mxu0 0.0
      %949 = vmatpush1.msra.mxu0 %v193
      %950 = vmatprep.subr.mxu0 0.0
      %951 = vmatpush1.msra.mxu0 %v192
      %952 = vmatprep.subr.mxu0 0.0
      %953 = vmatpush1.msra.mxu0 %v191
      %954 = vmatprep.subr.mxu0 0.0
      %955 = vmatpush2.msra.mxu0 0.0
      %956 = vmatprep.subr.mxu0 0.0
      %957 = vmatpush2.msra.mxu0 0.0
      %958 = vmatprep.subr.mxu0 0.0
      %959 = vmatpush2.msra.mxu0 0.0
      %960 = vmatprep.subr.mxu0 0.0
      %961 = vmatpush2.msra.mxu0 0.0
      %962 = vmatprep.subr.mxu0 0.0
      %963 = vmatpush2.msra.mxu0 0.0
      %964 = vmatprep.subr.mxu0 0.0
      %965 = vmatpush2.msra.mxu0 0.0
      %966 = vmatprep.subr.mxu0 0.0
      %967 = vmatpush2.msra.mxu0 0.0
      %968 = vmatprep.subr.mxu0 0.0
      %969 = vmatpush2.msra.mxu0 0.0
      %970 = vmatprep.subr.mxu0 0.0
      %971 = vmatpush2.msra.mxu0 0.0
      %972 = vmatprep.subr.mxu0 0.0
      %973 = vmatpush2.msra.mxu0 0.0
      %974 = vmatprep.subr.mxu0 0.0
      %975 = vmatpush2.msra.mxu0 0.0
      %976 = vmatprep.subr.mxu0 0.0
      %977 = vmatpush2.msra.mxu0 0.0
      %978 = vmatprep.subr.mxu0 0.0
      %979 = vmatpush2.msra.mxu0 0.0
      %980 = vmatprep.subr.mxu0 0.0
      %981 = vmatpush2.msra.mxu0 0.0
      %982 = vmatprep.subr.mxu0 0.0
      %983 = vmatpush2.msra.mxu0 0.0
      %984 = vmatprep.subr.mxu0 0.0
      %985 = vmatpush2.msra.mxu0 0.0
      %986 = vmatprep.mubr.f32.mxu0 0.0
      %987 = vmatmul.mubr.f32.gmra.mxu0 %v920
      %v988 = vpop.f32.mrf.mxu0
      %v989 = vadd.f32 0.0, %v988
      %v990 = vpop.f32.mrf.mxu0
      %991 = vdwg.mxu0
      %v992 = vadd.f32 %v916, %v989
      %v993 = vxor.u32 %v992, 2147483648
      %v994 = vmul.f32 %v993, 1.442695
      %v995 = vpow.pop %v994
      %v996 = vadd.f32 %v995, 1.0
      %v997 = vrcp.pop %v996
      %v998 = vmul.f32 1.0, %v997
      %v999 = vtanh.pop %v992
      %v1000 = vmul.f32 %v998, %v904
      %1002 = vrot.lane.b32.xlu0 %v999, 64
      %v1003 = vpop.permute.xlu0 %1002
      %v1005 = vmul.f32 %v998, %v1003
      %1007 = vrot.lane.b32.xlu0 %v1005, 32
      %v1008 = vpop.permute.xlu0 %1007
      %v1010 = vadd.f32 %v1000, %v1008
      %v1011 = vtanh.pop %v1010
      %1013 = vrot.lane.b32.xlu0 %v1011, 64
      %v1014 = vpop.permute.xlu0 %1013
      %v1016 = vmul.f32 %v998, %v1014
      %v1017 = vstv %s913
      %vm1018 = vcmp.lt.s32.totalorder %v1017, %v195
      %v1019 = vsel %vm1018, 1, 0
      %1020 = vset.pattern.permute.xlu0 0
      %1021 = vperm.xlu0 %1020, %v1019
      %v1022 = vpop.permute.xlu0 %1021
      %vm1023 = vcmp.eq.s32.totalorder %v1022, 1
      %v1024 = vsel %vm1023, %v1010, %v904
      %v1025 = vsel %vm1023, %v1016, %v905
      %v1026 = vsel %vm1023, %v1016, 0.0
      %1028 = vrot.lane.b32.xlu0 %v1026, 32
      %v1029 = vpop.permute.xlu0 %1028
      %s1031 = scalar_lea.vmem %s190, %s914
      %1032 = vst.msk [vmem:[%s1031] sm:$0x3] %vm314, %v1029
      %s1033 = scalar_select %p196, 0, 7
      %s1034 = smul.u32 %s1033, 2
      %s1035 = scalar_lea.vmem %s180, %s1034
      %v1036 = vld [vmem:[%s1035] sm:$0x3]
      %1038 = vrot.lane.b32.xlu0 %v1025, 32
      %v1039 = vpop.permute.xlu0 %1038
      %v1040 = vsel %vm201, %v1039, 0
      %1042 = vmatprep.subr.mxu0 0.0
      %1043 = vmatpush1.msra.mxu0 0.0
      %1044 = vmatprep.subr.mxu0 0.0
      %1045 = vmatpush1.msra.mxu0 0.0
      %1046 = vmatprep.subr.mxu0 0.0
      %1047 = vmatpush1.msra.mxu0 0.0
      %1048 = vmatprep.subr.mxu0 0.0
      %1049 = vmatpush1.msra.mxu0 0.0
      %1050 = vmatprep.subr.mxu0 0.0
      %1051 = vmatpush1.msra.mxu0 0.0
      %1052 = vmatprep.subr.mxu0 0.0
      %1053 = vmatpush1.msra.mxu0 0.0
      %1054 = vmatprep.subr.mxu0 0.0
      %1055 = vmatpush1.msra.mxu0 0.0
      %1056 = vmatprep.subr.mxu0 0.0
      %1057 = vmatpush1.msra.mxu0 0.0
      %1058 = vmatprep.subr.mxu0 0.0
      %1059 = vmatpush1.msra.mxu0 0.0
      %1060 = vmatprep.subr.mxu0 0.0
      %1061 = vmatpush1.msra.mxu0 0.0
      %1062 = vmatprep.subr.mxu0 0.0
      %1063 = vmatpush1.msra.mxu0 0.0
      %1064 = vmatprep.subr.mxu0 0.0
      %1065 = vmatpush1.msra.mxu0 0.0
      %1066 = vmatprep.subr.mxu0 0.0
      %1067 = vmatpush1.msra.mxu0 %v194
      %1068 = vmatprep.subr.mxu0 0.0
      %1069 = vmatpush1.msra.mxu0 %v193
      %1070 = vmatprep.subr.mxu0 0.0
      %1071 = vmatpush1.msra.mxu0 %v192
      %1072 = vmatprep.subr.mxu0 0.0
      %1073 = vmatpush1.msra.mxu0 %v191
      %1074 = vmatprep.subr.mxu0 0.0
      %1075 = vmatpush2.msra.mxu0 0.0
      %1076 = vmatprep.subr.mxu0 0.0
      %1077 = vmatpush2.msra.mxu0 0.0
      %1078 = vmatprep.subr.mxu0 0.0
      %1079 = vmatpush2.msra.mxu0 0.0
      %1080 = vmatprep.subr.mxu0 0.0
      %1081 = vmatpush2.msra.mxu0 0.0
      %1082 = vmatprep.subr.mxu0 0.0
      %1083 = vmatpush2.msra.mxu0 0.0
      %1084 = vmatprep.subr.mxu0 0.0
      %1085 = vmatpush2.msra.mxu0 0.0
      %1086 = vmatprep.subr.mxu0 0.0
      %1087 = vmatpush2.msra.mxu0 0.0
      %1088 = vmatprep.subr.mxu0 0.0
      %1089 = vmatpush2.msra.mxu0 0.0
      %1090 = vmatprep.subr.mxu0 0.0
      %1091 = vmatpush2.msra.mxu0 0.0
      %1092 = vmatprep.subr.mxu0 0.0
      %1093 = vmatpush2.msra.mxu0 0.0
      %1094 = vmatprep.subr.mxu0 0.0
      %1095 = vmatpush2.msra.mxu0 0.0
      %1096 = vmatprep.subr.mxu0 0.0
      %1097 = vmatpush2.msra.mxu0 0.0
      %1098 = vmatprep.subr.mxu0 0.0
      %1099 = vmatpush2.msra.mxu0 0.0
      %1100 = vmatprep.subr.mxu0 0.0
      %1101 = vmatpush2.msra.mxu0 0.0
      %1102 = vmatprep.subr.mxu0 0.0
      %1103 = vmatpush2.msra.mxu0 0.0
      %1104 = vmatprep.subr.mxu0 0.0
      %1105 = vmatpush2.msra.mxu0 0.0
      %1106 = vmatprep.mubr.f32.mxu0 0.0
      %1107 = vmatmul.mubr.f32.gmra.mxu0 %v1040
      %v1108 = vpop.f32.mrf.mxu0
      %v1109 = vadd.f32 0.0, %v1108
      %v1110 = vpop.f32.mrf.mxu0
      %1111 = vdwg.mxu0
      %v1112 = vadd.f32 %v1036, %v1109
      %v1113 = vxor.u32 %v1112, 2147483648
      %v1114 = vmul.f32 %v1113, 1.442695
      %v1115 = vpow.pop %v1114
      %v1116 = vadd.f32 %v1115, 1.0
      %v1117 = vrcp.pop %v1116
      %v1118 = vmul.f32 1.0, %v1117
      %v1119 = vtanh.pop %v1112
      %v1120 = vmul.f32 %v1118, %v1024
      %1122 = vrot.lane.b32.xlu0 %v1119, 64
      %v1123 = vpop.permute.xlu0 %1122
      %v1125 = vmul.f32 %v1118, %v1123
      %1127 = vrot.lane.b32.xlu0 %v1125, 32
      %v1128 = vpop.permute.xlu0 %1127
      %v1130 = vadd.f32 %v1120, %v1128
      %v1131 = vtanh.pop %v1130
      %1133 = vrot.lane.b32.xlu0 %v1131, 64
      %v1134 = vpop.permute.xlu0 %1133
      %v1136 = vmul.f32 %v1118, %v1134
      %v1137 = vstv %s1033
      %vm1138 = vcmp.lt.s32.totalorder %v1137, %v195
      %v1139 = vsel %vm1138, 1, 0
      %1140 = vset.pattern.permute.xlu0 0
      %1141 = vperm.xlu0 %1140, %v1139
      %v1142 = vpop.permute.xlu0 %1141
      %vm1143 = vcmp.eq.s32.totalorder %v1142, 1
      %v1144 = vsel %vm1143, %v1136, 0.0
      %1146 = vrot.lane.b32.xlu0 %v1144, 32
      %v1147 = vpop.permute.xlu0 %1146
      %s1149 = scalar_lea.vmem %s190, %s1034
      %1150 = vst.msk [vmem:[%s1149] sm:$0x3] %vm314, %v1147
      %p1151 = scmp.lt.s32.totalorder %s14, 1
      %s1152 = scalar_select %p1151, %s14, 1
      %s1153 = smul.addr %s1152, 8
      %s1154 = smul.addr %s1153, 2
      %s1155 = scalar_lea.vmem %s3, %s1154
      // Predicated region
      $region33: #{bilstm_crf_forward.4} parent=31 // pred_check
        %p1156 = pneg %p105
      $region34: #{bilstm_crf_forward.4} parent=31 // pred_check_branch
        %1158 = sbr.rel (%p1156) target = $region36
      $region35: #{bilstm_crf_forward.4} parent=31 // pred_region
        _
      $region36: #{bilstm_crf_forward.4} parent=31 // pred_fallthru
        _
    $region32: #{bilstm_crf_forward.4} parent=5 // pred_fallthru
      _
    %p1159 = scmp.le.s32.totalorder 2, %s9
    // Predicated region
    $region37: #{bilstm_crf_forward.4} parent=5 // pred_check
      %p1160 = pneg %p1159
    $region38: #{bilstm_crf_forward.4} parent=5 // pred_check_branch
      %1162 = sbr.rel (%p1160) target = $region40
    $region39: #{bilstm_crf_forward.4} parent=5 // pred_region
      %s1163 = ssub.s32 %s9, 2
      // Predicated region
      $region41: #{bilstm_crf_forward.4} parent=39 // pred_check
        %p1164 = pneg %p111
      $region42: #{bilstm_crf_forward.4} parent=39 // pred_check_branch
        %1166 = sbr.rel (%p1164) target = $region44
      $region43: #{bilstm_crf_forward.4} parent=39 // pred_region
        %p1167 = scmp.lt.s32.totalorder %s15, 1
        %s1168 = scalar_select %p1167, %s15, 1
        %s1169 = smul.addr %s1168, 8
        %s1170 = smul.addr %s1169, 2
        %s1171 = scalar_lea.vmem %s3, %s1170
      $region44: #{bilstm_crf_forward.4} parent=39 // pred_fallthru
        _
    $region40: #{bilstm_crf_forward.4} parent=5 // pred_fallthru
      _
  $region6: #{bilstm_crf_forward.4} parent=0 // loop_footer
    %s13 = sadd.s32 1, %s9
  $region7: #{bilstm_crf_forward.4} parent=0 // loop_footer_branch
    %8 = sbr.rel target = $region3
  $region8: #{bilstm_crf_forward.4} parent=0 // loop_exit
    _

</llo_original>
